<compile_context>
chip_gen: v6e
topology: v6e:2x2x1
jax: 0.10.0
libtpu: 0.0.40
codegen_flags: <defaults>
</compile_context>

<pallas_src>
import functools
import math

import jax
import jax.numpy as jnp
from jax.experimental import pallas as pl
from jax.experimental.pallas import tpu as pltpu


# ------------------------- BlockFCN structure --------------------------------

CHANNELS = (1, 128, 256, 256)     # channels=[1, 128, 256, 256]
KERNELS = (8, 5, 3)               # kernels=[8, 5, 3]
BN_EPS = 1e-3                     # eps=0.001 in the PyTorch module


# ------------------------- Pallas kernel -------------------------------------

def _tap_stripe(h, k):
    """In-VMEM im2col for one conv layer, on the full aligned time stripe.

    h: (B, T, C).  Returns (B, T, k*C) where channel block j holds h[:, i+j, :]
    (zeros in the j tail rows).  Tail rows only ever feed output rows that are
    discarded by the masked pooling epilogue, so they never pollute valid data.
    """
    if k == 1:
        return h
    B, T, C = h.shape
    pieces = [h]
    for j in range(1, k):
        pieces.append(jnp.concatenate(
            [h[:, j:, :], jnp.zeros((B, j, C), h.dtype)], axis=1))
    return jnp.concatenate(pieces, axis=-1)


def _block_fcn_kernel(x_ref, w1_ref, s1_ref, b1_ref,
                      w2_ref, s2_ref, b2_ref,
                      w3_ref, s3_ref, b3_ref,
                      o_ref, *, k2, k3, valid_len):
    """Whole BlockFCN forward for one block of batch elements.

    x_ref : (B, T, K1) f32      layer-1 im2col stripe (rows >= T-K1+1 zero padded)
    w1_ref: (K1, C1) f32        layer-1 weight (f32 dot, tiny contraction)
    w2_ref: (K2*C1, C2) bf16    layer-2 weight, taps flattened into contraction
    w3_ref: (K3*C2, C3) bf16    layer-3 weight
    s*/b* : (1, C*) f32         folded BN scale / (BN + conv-bias) bias
    o_ref : (B, 1, C3) f32      globally average-pooled output
    """
    B, T, k1 = x_ref.shape
    c1 = w1_ref.shape[1]
    c2 = w2_ref.shape[1]
    c3 = w3_ref.shape[1]

    # ---- layer 1: Conv1d(1->128, K=8) + BN + ReLU  (f32, one small dot) ------
    a1 = x_ref[...].reshape(B * T, k1)
    h = jnp.dot(a1, w1_ref[...], preferred_element_type=jnp.float32)
    h = jnp.maximum(h * s1_ref[...] + b1_ref[...], 0.0)
    h = h.reshape(B, T, c1).astype(jnp.bfloat16)          # single cast per layer

    # ---- layer 2: Conv1d(128->256, K=5) + BN + ReLU  (one 640-deep MXU dot) --
    a2 = _tap_stripe(h, k2).reshape(B * T, k2 * c1)
    h = jnp.dot(a2, w2_ref[...], preferred_element_type=jnp.float32)
    h = jnp.maximum(h * s2_ref[...] + b2_ref[...], 0.0)
    h = h.reshape(B, T, c2).astype(jnp.bfloat16)

    # ---- layer 3: Conv1d(256->256, K=3) + BN + ReLU  (one 768-deep MXU dot) --
    a3 = _tap_stripe(h, k3).reshape(B * T, k3 * c2)
    h = jnp.dot(a3, w3_ref[...], preferred_element_type=jnp.float32)
    h = jnp.maximum(h * s3_ref[...] + b3_ref[...], 0.0)
    h = h.reshape(B, T, c3)

    # ---- fused global AvgPool1d over the valid_len valid time rows -----------
    t = jax.lax.broadcasted_iota(jnp.int32, h.shape, 1)
    h = jnp.where(t < valid_len, h, 0.0)
    o_ref[...] = jnp.sum(h, axis=1, keepdims=True) * (1.0 / valid_len)


def _pick_batch_block(n, max_blk=8):
    """Largest divisor of n (<= max_blk) that still leaves >= 2 grid steps
    (so both v7x TensorCores get work); falls back to the largest divisor."""
    divisors = [b for b in range(1, min(max_blk, n) + 1) if n % b == 0]
    multi = [b for b in divisors if n // b >= 2]
    return max(multi) if multi else max(divisors)


def block_fcn_forward(x_ncl, params):
    """x_ncl: (N, 1, T) f32 (PyTorch NCL).  Returns (N, C3, 1) f32 (NCL)."""
    N, cin, T = x_ncl.shape
    assert cin == 1, "BlockFCN layer 1 expects a single input channel"
    k1, k2, k3 = (int(p["w"].shape[0]) for p in params)
    c1, c2, c3 = (int(p["w"].shape[2]) for p in params)
    valid_len = T - (k1 + k2 + k3) + 3            # AvgPool1d window size
    assert valid_len >= 1, "time_steps too small for the kernel sizes"

    # Layer-1 im2col built in the wrapper: Cin == 1 so it is only (N, T, k1)
    # (a few KB, fused by XLA into the input transpose) and it removes the
    # degenerate 1-lane input layout from the kernel.
    x2 = x_ncl[:, 0, :]                                        # (N, T)
    xp = jnp.pad(x2, ((0, 0), (0, k1 - 1)))
    x_cols = jnp.stack([xp[:, k:k + T] for k in range(k1)], axis=-1)   # (N, T, k1)

    # Weights with taps flattened into the contraction dim; bf16 MXU operands
    # for the wide layers, f32 for the tiny layer-1 dot.
    w1 = params[0]["w"].reshape(k1, c1)
    w2 = params[1]["w"].reshape(k2 * c1, c2).astype(jnp.bfloat16)
    w3 = params[2]["w"].reshape(k3 * c2, c3).astype(jnp.bfloat16)
    s1 = params[0]["scale"].reshape(1, c1)
    b1 = params[0]["bias"].reshape(1, c1)
    s2 = params[1]["scale"].reshape(1, c2)
    b2 = params[1]["bias"].reshape(1, c2)
    s3 = params[2]["scale"].reshape(1, c3)
    b3 = params[2]["bias"].reshape(1, c3)

    b_blk = _pick_batch_block(N)
    grid = (N // b_blk,)
    kernel = functools.partial(_block_fcn_kernel, k2=k2, k3=k3,
                               valid_len=valid_len)

    def const(n):
        return (0, 0)

    out = pl.pallas_call(
        kernel,
        out_shape=jax.ShapeDtypeStruct((N, 1, c3), jnp.float32),
        grid=grid,
        in_specs=[
            pl.BlockSpec((b_blk, T, k1), lambda n: (n, 0, 0)),
            pl.BlockSpec((k1, c1), const),
            pl.BlockSpec((1, c1), const),
            pl.BlockSpec((1, c1), const),
            pl.BlockSpec((k2 * c1, c2), const),
            pl.BlockSpec((1, c2), const),
            pl.BlockSpec((1, c2), const),
            pl.BlockSpec((k3 * c2, c3), const),
            pl.BlockSpec((1, c3), const),
            pl.BlockSpec((1, c3), const),
        ],
        out_specs=pl.BlockSpec((b_blk, 1, c3), lambda n: (n, 0, 0)),
        compiler_params=pltpu.CompilerParams(
            dimension_semantics=("parallel",)),
    )(x_cols, w1, s1, b1, w2, s2, b2, w3, s3, b3)

    return jnp.transpose(out, (0, 2, 1))                        # (N, C3, 1) NCL


# ------------------------- parameters -----------------------------------------

def init_params(key):
    """Deterministic synthetic parameters; conv bias + BN running stats pre-folded."""
    params = []
    for cin, cout, k in zip(CHANNELS[:-1], CHANNELS[1:], KERNELS):
        key, kw, kb, kg, kbt, km = jax.random.split(key, 6)
        std = math.sqrt(2.0 / (cin * k))
        w = std * jax.random.normal(kw, (k, cin, cout), jnp.float32)
        conv_b = 0.1 * jax.random.normal(kb, (cout,), jnp.float32)
        gamma = 1.0 + 0.1 * jax.random.normal(kg, (cout,), jnp.float32)
        beta = 0.1 * jax.random.normal(kbt, (cout,), jnp.float32)
        mean = 0.1 * jax.random.normal(km, (cout,), jnp.float32)
        var = jnp.ones((cout,), jnp.float32)
        inv_std = 1.0 / jnp.sqrt(var + BN_EPS)
        scale = gamma * inv_std                  # y = conv_sum * scale + bias
        bias = beta + (conv_b - mean) * scale
        params.append({"w": w, "scale": scale, "bias": bias})
    return params


if __name__ == "__main__":
    TIME_STEPS = 32                              # > sum(kernels) - len(kernels)
    x = jax.random.normal(jax.random.PRNGKey(0),
                          (2, CHANNELS[0], TIME_STEPS), jnp.float32)   # (N, C, T)
    params = init_params(jax.random.PRNGKey(42))
    fwd = jax.jit(lambda inp: block_fcn_forward(inp, params))
    out = fwd(x)
    jax.block_until_ready(out)
    assert out.shape == (2, CHANNELS[-1], 1), out.shape
    assert out.dtype == jnp.float32
    print("KERNEL_OK")
</pallas_src>

<mosaic_0001>
module attributes {stable_mosaic.version = 11 : i64} {
  func.func @_block_fcn_kernel(%arg0: i32, %arg1: memref<1x32x8xf32, #tpu.memory_space<vmem>>, %arg2: memref<8x128xf32, #tpu.memory_space<vmem>>, %arg3: memref<1x128xf32, #tpu.memory_space<vmem>>, %arg4: memref<1x128xf32, #tpu.memory_space<vmem>>, %arg5: memref<640x256xbf16, #tpu.memory_space<vmem>>, %arg6: memref<1x256xf32, #tpu.memory_space<vmem>>, %arg7: memref<1x256xf32, #tpu.memory_space<vmem>>, %arg8: memref<768x256xbf16, #tpu.memory_space<vmem>>, %arg9: memref<1x256xf32, #tpu.memory_space<vmem>>, %arg10: memref<1x256xf32, #tpu.memory_space<vmem>>, %arg11: memref<1x1x256xf32, #tpu.memory_space<vmem>>) attributes {dimension_semantics = [#tpu.dimension_semantics<parallel>], iteration_bounds = array<i64: 2>, scalar_prefetch = 0 : i64, scratch_operands = 0 : i64, tpu.core_type = #tpu.core_type<tc>, window_params = [{transform_indices = @transform_0, window_bounds = array<i64: 1, 32, 8>}, {pipeline_mode = #tpu.pipeline_mode<synchronous>, transform_indices = @transform_1, window_bounds = array<i64: 8, 128>}, {pipeline_mode = #tpu.pipeline_mode<synchronous>, transform_indices = @transform_2, window_bounds = array<i64: 1, 128>}, {pipeline_mode = #tpu.pipeline_mode<synchronous>, transform_indices = @transform_3, window_bounds = array<i64: 1, 128>}, {pipeline_mode = #tpu.pipeline_mode<synchronous>, transform_indices = @transform_4, window_bounds = array<i64: 640, 256>}, {pipeline_mode = #tpu.pipeline_mode<synchronous>, transform_indices = @transform_5, window_bounds = array<i64: 1, 256>}, {pipeline_mode = #tpu.pipeline_mode<synchronous>, transform_indices = @transform_6, window_bounds = array<i64: 1, 256>}, {pipeline_mode = #tpu.pipeline_mode<synchronous>, transform_indices = @transform_7, window_bounds = array<i64: 768, 256>}, {pipeline_mode = #tpu.pipeline_mode<synchronous>, transform_indices = @transform_8, window_bounds = array<i64: 1, 256>}, {pipeline_mode = #tpu.pipeline_mode<synchronous>, transform_indices = @transform_9, window_bounds = array<i64: 1, 256>}, {transform_indices = @transform_10, window_bounds = array<i64: 1, 1, 256>}]} {
    %c0 = arith.constant 0 : index
    %c0_0 = arith.constant 0 : index
    %c0_1 = arith.constant 0 : index
    %0 = vector.load %arg1[%c0, %c0_0, %c0_1] : memref<1x32x8xf32, #tpu.memory_space<vmem>>, vector<1x32x8xf32>
    %1 = vector.shape_cast %0 : vector<1x32x8xf32> to vector<32x8xf32>
    %c0_2 = arith.constant 0 : index
    %c0_3 = arith.constant 0 : index
    %2 = vector.load %arg2[%c0_2, %c0_3] : memref<8x128xf32, #tpu.memory_space<vmem>>, vector<8x128xf32>
    %cst = arith.constant dense<0.000000e+00> : vector<32x128xf32>
    %3 = tpu.matmul %1, %2, %cst {dimension_numbers = #tpu.dot_dimension_numbers<[1], [0], [0], [1], [0, 0, 1, 1], [], []>} : vector<32x8xf32>, vector<8x128xf32>, vector<32x128xf32> -> vector<32x128xf32>
    %c0_4 = arith.constant 0 : index
    %c0_5 = arith.constant 0 : index
    %4 = vector.load %arg3[%c0_4, %c0_5] : memref<1x128xf32, #tpu.memory_space<vmem>>, vector<1x128xf32>
    %5 = vector.broadcast %4 : vector<1x128xf32> to vector<32x128xf32>
    %6 = arith.mulf %3, %5 : vector<32x128xf32>
    %c0_6 = arith.constant 0 : index
    %c0_7 = arith.constant 0 : index
    %7 = vector.load %arg4[%c0_6, %c0_7] : memref<1x128xf32, #tpu.memory_space<vmem>>, vector<1x128xf32>
    %8 = vector.broadcast %7 : vector<1x128xf32> to vector<32x128xf32>
    %9 = arith.addf %6, %8 : vector<32x128xf32>
    %cst_8 = arith.constant 0.000000e+00 : f32
    %10 = vector.broadcast %cst_8 : f32 to vector<32x128xf32>
    %11 = arith.maximumf %9, %10 : vector<32x128xf32>
    %12 = vector.shape_cast %11 : vector<32x128xf32> to vector<1x32x128xf32>
    %13 = arith.truncf %12 : vector<1x32x128xf32> to vector<1x32x128xbf16>
    %14 = vector.extract_strided_slice %13 {offsets = [0, 1, 0], sizes = [1, 31, 128], strides = [1, 1, 1]} : vector<1x32x128xbf16> to vector<1x31x128xbf16>
    %cst_9 = arith.constant 0.000000e+00 : bf16
    %15 = vector.broadcast %cst_9 : bf16 to vector<1x1x128xbf16>
    %16 = tpu.concatenate %14, %15 in 1 : vector<1x31x128xbf16>, vector<1x1x128xbf16> -> vector<1x32x128xbf16>
    %17 = vector.extract_strided_slice %13 {offsets = [0, 2, 0], sizes = [1, 30, 128], strides = [1, 1, 1]} : vector<1x32x128xbf16> to vector<1x30x128xbf16>
    %cst_10 = arith.constant 0.000000e+00 : bf16
    %18 = vector.broadcast %cst_10 : bf16 to vector<1x2x128xbf16>
    %19 = tpu.concatenate %17, %18 in 1 : vector<1x30x128xbf16>, vector<1x2x128xbf16> -> vector<1x32x128xbf16>
    %20 = vector.extract_strided_slice %13 {offsets = [0, 3, 0], sizes = [1, 29, 128], strides = [1, 1, 1]} : vector<1x32x128xbf16> to vector<1x29x128xbf16>
    %cst_11 = arith.constant 0.000000e+00 : bf16
    %21 = vector.broadcast %cst_11 : bf16 to vector<1x3x128xbf16>
    %22 = tpu.concatenate %20, %21 in 1 : vector<1x29x128xbf16>, vector<1x3x128xbf16> -> vector<1x32x128xbf16>
    %23 = vector.extract_strided_slice %13 {offsets = [0, 4, 0], sizes = [1, 28, 128], strides = [1, 1, 1]} : vector<1x32x128xbf16> to vector<1x28x128xbf16>
    %cst_12 = arith.constant 0.000000e+00 : bf16
    %24 = vector.broadcast %cst_12 : bf16 to vector<1x4x128xbf16>
    %25 = tpu.concatenate %23, %24 in 1 : vector<1x28x128xbf16>, vector<1x4x128xbf16> -> vector<1x32x128xbf16>
    %26 = tpu.concatenate %13, %16, %19, %22, %25 in 2 : vector<1x32x128xbf16>, vector<1x32x128xbf16>, vector<1x32x128xbf16>, vector<1x32x128xbf16>, vector<1x32x128xbf16> -> vector<1x32x640xbf16>
    %27 = vector.shape_cast %26 : vector<1x32x640xbf16> to vector<32x640xbf16>
    %c0_13 = arith.constant 0 : index
    %c0_14 = arith.constant 0 : index
    %28 = vector.load %arg5[%c0_13, %c0_14] : memref<640x256xbf16, #tpu.memory_space<vmem>>, vector<640x256xbf16>
    %cst_15 = arith.constant dense<0.000000e+00> : vector<32x256xf32>
    %29 = tpu.matmul %27, %28, %cst_15 {dimension_numbers = #tpu.dot_dimension_numbers<[1], [0], [0], [1], [0, 0, 1, 1], [], []>} : vector<32x640xbf16>, vector<640x256xbf16>, vector<32x256xf32> -> vector<32x256xf32>
    %c0_16 = arith.constant 0 : index
    %c0_17 = arith.constant 0 : index
    %30 = vector.load %arg6[%c0_16, %c0_17] : memref<1x256xf32, #tpu.memory_space<vmem>>, vector<1x256xf32>
    %31 = vector.broadcast %30 : vector<1x256xf32> to vector<32x256xf32>
    %32 = arith.mulf %29, %31 : vector<32x256xf32>
    %c0_18 = arith.constant 0 : index
    %c0_19 = arith.constant 0 : index
    %33 = vector.load %arg7[%c0_18, %c0_19] : memref<1x256xf32, #tpu.memory_space<vmem>>, vector<1x256xf32>
    %34 = vector.broadcast %33 : vector<1x256xf32> to vector<32x256xf32>
    %35 = arith.addf %32, %34 : vector<32x256xf32>
    %cst_20 = arith.constant 0.000000e+00 : f32
    %36 = vector.broadcast %cst_20 : f32 to vector<32x256xf32>
    %37 = arith.maximumf %35, %36 : vector<32x256xf32>
    %38 = vector.shape_cast %37 : vector<32x256xf32> to vector<1x32x256xf32>
    %39 = arith.truncf %38 : vector<1x32x256xf32> to vector<1x32x256xbf16>
    %40 = vector.extract_strided_slice %39 {offsets = [0, 1, 0], sizes = [1, 31, 256], strides = [1, 1, 1]} : vector<1x32x256xbf16> to vector<1x31x256xbf16>
    %cst_21 = arith.constant 0.000000e+00 : bf16
    %41 = vector.broadcast %cst_21 : bf16 to vector<1x1x256xbf16>
    %42 = tpu.concatenate %40, %41 in 1 : vector<1x31x256xbf16>, vector<1x1x256xbf16> -> vector<1x32x256xbf16>
    %43 = vector.extract_strided_slice %39 {offsets = [0, 2, 0], sizes = [1, 30, 256], strides = [1, 1, 1]} : vector<1x32x256xbf16> to vector<1x30x256xbf16>
    %cst_22 = arith.constant 0.000000e+00 : bf16
    %44 = vector.broadcast %cst_22 : bf16 to vector<1x2x256xbf16>
    %45 = tpu.concatenate %43, %44 in 1 : vector<1x30x256xbf16>, vector<1x2x256xbf16> -> vector<1x32x256xbf16>
    %46 = tpu.concatenate %39, %42, %45 in 2 : vector<1x32x256xbf16>, vector<1x32x256xbf16>, vector<1x32x256xbf16> -> vector<1x32x768xbf16>
    %47 = vector.shape_cast %46 : vector<1x32x768xbf16> to vector<32x768xbf16>
    %c0_23 = arith.constant 0 : index
    %c0_24 = arith.constant 0 : index
    %48 = vector.load %arg8[%c0_23, %c0_24] : memref<768x256xbf16, #tpu.memory_space<vmem>>, vector<768x256xbf16>
    %cst_25 = arith.constant dense<0.000000e+00> : vector<32x256xf32>
    %49 = tpu.matmul %47, %48, %cst_25 {dimension_numbers = #tpu.dot_dimension_numbers<[1], [0], [0], [1], [0, 0, 1, 1], [], []>} : vector<32x768xbf16>, vector<768x256xbf16>, vector<32x256xf32> -> vector<32x256xf32>
    %c0_26 = arith.constant 0 : index
    %c0_27 = arith.constant 0 : index
    %50 = vector.load %arg9[%c0_26, %c0_27] : memref<1x256xf32, #tpu.memory_space<vmem>>, vector<1x256xf32>
    %51 = vector.broadcast %50 : vector<1x256xf32> to vector<32x256xf32>
    %52 = arith.mulf %49, %51 : vector<32x256xf32>
    %c0_28 = arith.constant 0 : index
    %c0_29 = arith.constant 0 : index
    %53 = vector.load %arg10[%c0_28, %c0_29] : memref<1x256xf32, #tpu.memory_space<vmem>>, vector<1x256xf32>
    %54 = vector.broadcast %53 : vector<1x256xf32> to vector<32x256xf32>
    %55 = arith.addf %52, %54 : vector<32x256xf32>
    %cst_30 = arith.constant 0.000000e+00 : f32
    %56 = vector.broadcast %cst_30 : f32 to vector<32x256xf32>
    %57 = arith.maximumf %55, %56 : vector<32x256xf32>
    %58 = vector.shape_cast %57 : vector<32x256xf32> to vector<1x32x256xf32>
    %59 = tpu.iota {dimensions = array<i32: 1>} : vector<1x32x256xi32>
    %c19_i32 = arith.constant 19 : i32
    %60 = vector.broadcast %c19_i32 : i32 to vector<1x32x256xi32>
    %61 = arith.cmpi slt, %59, %60 : vector<1x32x256xi32>
    %cst_31 = arith.constant 0.000000e+00 : f32
    %62 = vector.broadcast %cst_31 : f32 to vector<1x32x256xf32>
    %63 = arith.select %61, %58, %62 : vector<1x32x256xi1>, vector<1x32x256xf32>
    %cst_32 = arith.constant dense<0.000000e+00> : vector<1x256xf32>
    %64 = vector.multi_reduction <add>, %63, %cst_32 [1] : vector<1x32x256xf32> to vector<1x256xf32>
    %65 = vector.shape_cast %64 : vector<1x256xf32> to vector<1x1x256xf32>
    %cst_33 = arith.constant 0.0526315793 : f32
    %66 = vector.broadcast %cst_33 : f32 to vector<1x1x256xf32>
    %67 = arith.mulf %65, %66 : vector<1x1x256xf32>
    %c0_34 = arith.constant 0 : index
    %c0_35 = arith.constant 0 : index
    %c0_36 = arith.constant 0 : index
    %68 = vector.load %arg11[%c0_34, %c0_35, %c0_36] : memref<1x1x256xf32, #tpu.memory_space<vmem>>, vector<1x1x256xf32>
    tpu.vector_store %arg11[%c0_34, %c0_35, %c0_36], %67 {strides = array<i32>} : memref<1x1x256xf32, #tpu.memory_space<vmem>>, vector<1x1x256xf32>,
    return
  }
  func.func @transform_0(%arg0: i32) -> (i32, i32, i32) {
    %c0_i32 = arith.constant 0 : i32
    %c0_i32_0 = arith.constant 0 : i32
    %c0_i32_1 = arith.constant 0 : i32
    return %arg0, %c0_i32, %c0_i32_0 : i32, i32, i32
  }
  func.func @transform_1(%arg0: i32) -> (i32, i32) {
    %c0_i32 = arith.constant 0 : i32
    %c0_i32_0 = arith.constant 0 : i32
    %c0_i32_1 = arith.constant 0 : i32
    return %c0_i32, %c0_i32_0 : i32, i32
  }
  func.func @transform_2(%arg0: i32) -> (i32, i32) {
    %c0_i32 = arith.constant 0 : i32
    %c0_i32_0 = arith.constant 0 : i32
    %c0_i32_1 = arith.constant 0 : i32
    return %c0_i32, %c0_i32_0 : i32, i32
  }
  func.func @transform_3(%arg0: i32) -> (i32, i32) {
    %c0_i32 = arith.constant 0 : i32
    %c0_i32_0 = arith.constant 0 : i32
    %c0_i32_1 = arith.constant 0 : i32
    return %c0_i32, %c0_i32_0 : i32, i32
  }
  func.func @transform_4(%arg0: i32) -> (i32, i32) {
    %c0_i32 = arith.constant 0 : i32
    %c0_i32_0 = arith.constant 0 : i32
    %c0_i32_1 = arith.constant 0 : i32
    return %c0_i32, %c0_i32_0 : i32, i32
  }
  func.func @transform_5(%arg0: i32) -> (i32, i32) {
    %c0_i32 = arith.constant 0 : i32
    %c0_i32_0 = arith.constant 0 : i32
    %c0_i32_1 = arith.constant 0 : i32
    return %c0_i32, %c0_i32_0 : i32, i32
  }
  func.func @transform_6(%arg0: i32) -> (i32, i32) {
    %c0_i32 = arith.constant 0 : i32
    %c0_i32_0 = arith.constant 0 : i32
    %c0_i32_1 = arith.constant 0 : i32
    return %c0_i32, %c0_i32_0 : i32, i32
  }
  func.func @transform_7(%arg0: i32) -> (i32, i32) {
    %c0_i32 = arith.constant 0 : i32
    %c0_i32_0 = arith.constant 0 : i32
    %c0_i32_1 = arith.constant 0 : i32
    return %c0_i32, %c0_i32_0 : i32, i32
  }
  func.func @transform_8(%arg0: i32) -> (i32, i32) {
    %c0_i32 = arith.constant 0 : i32
    %c0_i32_0 = arith.constant 0 : i32
    %c0_i32_1 = arith.constant 0 : i32
    return %c0_i32, %c0_i32_0 : i32, i32
  }
  func.func @transform_9(%arg0: i32) -> (i32, i32) {
    %c0_i32 = arith.constant 0 : i32
    %c0_i32_0 = arith.constant 0 : i32
    %c0_i32_1 = arith.constant 0 : i32
    return %c0_i32, %c0_i32_0 : i32, i32
  }
  func.func @transform_10(%arg0: i32) -> (i32, i32, i32) {
    %c0_i32 = arith.constant 0 : i32
    %c0_i32_0 = arith.constant 0 : i32
    %c0_i32_1 = arith.constant 0 : i32
    return %arg0, %c0_i32, %c0_i32_0 : i32, i32, i32
  }
}

</mosaic_0001>

<llo_original>
// kernel: _lambda_.1
$region0: #{_lambda_.1}
  #allocation0 [shape = 'u32[]', space=smem, size = 0x4, offset = 0x4, fixed_abs, tag = 'smem constant byte address 0x4 - core index']
  #allocation1 [shape = 'u32[144,128]{1,0:T(1,128)}', space=vmem, size = 0x12000, scoped, tag = 'internal scratch']
  %s0 = inlined_call_operand.vmem [shape: f32[2,32,8], index: 0, kind: input, shape index: {}]
  %s1 = inlined_call_operand.vmem [shape: f32[8,128], index: 1, kind: input, shape index: {}]
  %s2 = inlined_call_operand.vmem [shape: f32[1,128], index: 2, kind: input, shape index: {}]
  %s3 = inlined_call_operand.vmem [shape: f32[1,128], index: 3, kind: input, shape index: {}]
  %s4 = inlined_call_operand.hbm [shape: bf16[640,256], index: 4, kind: input, shape index: {}]
  %s5 = inlined_call_operand.vmem [shape: f32[1,256], index: 5, kind: input, shape index: {}]
  %s6 = inlined_call_operand.vmem [shape: f32[1,256], index: 6, kind: input, shape index: {}]
  %s7 = inlined_call_operand.vmem [shape: bf16[768,256], index: 7, kind: input, shape index: {}]
  %s8 = inlined_call_operand.vmem [shape: f32[1,256], index: 8, kind: input, shape index: {}]
  %s9 = inlined_call_operand.vmem [shape: f32[1,256], index: 9, kind: input, shape index: {}]
  %s10 = inlined_call_operand.hbm [shape: f32[2,1,256], index: 10, kind: output, shape index: {}]
  %s11 = sld [smem:[#allocation0]]
  $region77: #{_lambda_.1} parent=0
    _
  %s13 = ssub.s32 1, %s11
  %s14 = scalar_select 0, %s13, %s11
  $region1: #{_lambda_.1} parent=0
    #allocation2 [shape = 'u8[327680]{0}', space=vmem, size = 0x50000, scoped, tag = 'input window, operand 4, single buffered']
    #allocation3 [shape = 's32[2]{0}', space=sflag, size = 0x8, scoped, tag = 'scoped memory for _lambda_.1']
    #allocation4 [shape = 's32[2]{0}', space=sflag, size = 0x8, scoped, tag = 'scoped memory for _lambda_.1']
    #allocation5 [shape = 'u8[2048]{0}', space=vmem, size = 0x800, scoped, tag = 'output window, operand 0']
    %15 = vsyncpa [#allocation3], 0
    %16 = vsyncpa [#allocation4], 0
    %s17 = scalar_lea.sflag [#allocation4], 1
    %18 = vsyncpa %s17, 0
    loop: start=0, step=1, limit=4
    $region2: #{_lambda_.1} parent=1 // loop_pre_header
      _
    $region3: #{_lambda_.1} parent=1 // loop_header
      %s20 = sphi 0, %s24
      %p21 = scmp.ge.s32.totalorder %s20, 4
      %s30 = sphi 0, %s32
      %s33 = sphi 0, %s30
      %s34 = sphi 0, %s33
      %s50 = sphi 0, %s34
      %s54 = sphi 0, %s54
      %s56 = sphi 0, %s54
      %s57 = sphi 0, %s56
      %s71 = sphi 0, %s57
      %s75 = sphi 0, %s75
      %s77 = sphi 0, %s75
      %s78 = sphi 0, %s77
      %s92 = sphi 0, %s78
      %s96 = sphi 0, %s96
      %s98 = sphi 0, %s96
      %s99 = sphi 0, %s98
      %s113 = sphi 0, %s99
      %s117 = sphi 0, %s117
      %s119 = sphi 0, %s117
      %s120 = sphi 0, %s119
      %s134 = sphi 0, %s120
      %s138 = sphi 0, %s138
      %s140 = sphi 0, %s138
      %s141 = sphi 0, %s140
      %s155 = sphi 0, %s141
      %s159 = sphi 0, %s159
      %s161 = sphi 0, %s159
      %s162 = sphi 0, %s161
      %s176 = sphi 0, %s162
      %s180 = sphi 0, %s180
      %s182 = sphi 0, %s180
      %s183 = sphi 0, %s182
      %s197 = sphi 0, %s183
      %s201 = sphi 0, %s201
      %s203 = sphi 0, %s201
      %s204 = sphi 0, %s203
      %s218 = sphi 0, %s204
      %s222 = sphi 0, %s222
      %s224 = sphi 0, %s222
      %s225 = sphi 0, %s224
      %s239 = sphi 0, %s225
      %s245 = sphi 0, %s247
      %s248 = sphi 0, %s245
      %s249 = sphi 0, %s248
      %s265 = sphi 0, %s249
    $region4: #{_lambda_.1} parent=1 // loop_header_branch
      %23 = sbr.rel (%p21) target = $region8
    $region5: #{_lambda_.1} parent=1 // loop_body
      %s25 = ssub.s32 %s20, 1
      %s26 = ssub.s32 %s20, 2
      %s27 = sadd.s32 %s20, 1
      %s28 = ssub.s32 %s20, %s27
      %p29 = scmp.eq.s32.totalorder %s28, 0
      %s31 = sadd.s32 %s30, 1
      %s32 = scalar_select %p29, %s30, %s31
      %p35 = pneg %p29
      %p36 = scmp.eq.s32.totalorder %s20, 1
      %p37 = por %p35, %p36
      %p38 = scmp.ne.s32.totalorder %s30, %s33
      %p39 = scmp.eq.s32.totalorder %s20, 0
      %p40 = por %p38, %p39
      %p41 = scmp.ne.s32.totalorder %s30, %s33
      %p42 = scmp.eq.s32.totalorder %s25, 1
      %p43 = por %p41, %p42
      %p44 = scmp.ne.s32.totalorder %s33, %s34
      %p45 = scmp.eq.s32.totalorder %s25, 0
      %p46 = por %p44, %p45
      %p47 = scmp.ne.s32.totalorder %s33, %s34
      %p48 = scmp.eq.s32.totalorder %s26, 1
      %p49 = por %p47, %p48
      %p51 = scmp.ne.s32.totalorder %s34, %s50
      %p52 = scmp.eq.s32.totalorder %s26, 0
      %p53 = por %p51, %p52
      %s55 = sadd.s32 %s54, 1
      %p58 = scmp.eq.s32.totalorder %s20, 1
      %p59 = scmp.ne.s32.totalorder %s54, %s56
      %p60 = scmp.eq.s32.totalorder %s20, 0
      %p61 = por %p59, %p60
      %p62 = scmp.ne.s32.totalorder %s54, %s56
      %p63 = scmp.eq.s32.totalorder %s25, 1
      %p64 = por %p62, %p63
      %p65 = scmp.ne.s32.totalorder %s56, %s57
      %p66 = scmp.eq.s32.totalorder %s25, 0
      %p67 = por %p65, %p66
      %p68 = scmp.ne.s32.totalorder %s56, %s57
      %p69 = scmp.eq.s32.totalorder %s26, 1
      %p70 = por %p68, %p69
      %p72 = scmp.ne.s32.totalorder %s57, %s71
      %p73 = scmp.eq.s32.totalorder %s26, 0
      %p74 = por %p72, %p73
      %s76 = sadd.s32 %s75, 1
      %p79 = scmp.eq.s32.totalorder %s20, 1
      %p80 = scmp.ne.s32.totalorder %s75, %s77
      %p81 = scmp.eq.s32.totalorder %s20, 0
      %p82 = por %p80, %p81
      %p83 = scmp.ne.s32.totalorder %s75, %s77
      %p84 = scmp.eq.s32.totalorder %s25, 1
      %p85 = por %p83, %p84
      %p86 = scmp.ne.s32.totalorder %s77, %s78
      %p87 = scmp.eq.s32.totalorder %s25, 0
      %p88 = por %p86, %p87
      %p89 = scmp.ne.s32.totalorder %s77, %s78
      %p90 = scmp.eq.s32.totalorder %s26, 1
      %p91 = por %p89, %p90
      %p93 = scmp.ne.s32.totalorder %s78, %s92
      %p94 = scmp.eq.s32.totalorder %s26, 0
      %p95 = por %p93, %p94
      %s97 = sadd.s32 %s96, 1
      %p100 = scmp.eq.s32.totalorder %s20, 1
      %p101 = scmp.ne.s32.totalorder %s96, %s98
      %p102 = scmp.eq.s32.totalorder %s20, 0
      %p103 = por %p101, %p102
      %p104 = scmp.ne.s32.totalorder %s96, %s98
      %p105 = scmp.eq.s32.totalorder %s25, 1
      %p106 = por %p104, %p105
      %p107 = scmp.ne.s32.totalorder %s98, %s99
      %p108 = scmp.eq.s32.totalorder %s25, 0
      %p109 = por %p107, %p108
      %p110 = scmp.ne.s32.totalorder %s98, %s99
      %p111 = scmp.eq.s32.totalorder %s26, 1
      %p112 = por %p110, %p111
      %p114 = scmp.ne.s32.totalorder %s99, %s113
      %p115 = scmp.eq.s32.totalorder %s26, 0
      %p116 = por %p114, %p115
      %s118 = sadd.s32 %s117, 1
      %p121 = scmp.eq.s32.totalorder %s20, 1
      %p122 = scmp.ne.s32.totalorder %s117, %s119
      %p123 = scmp.eq.s32.totalorder %s20, 0
      %p124 = por %p122, %p123
      %p125 = scmp.ne.s32.totalorder %s117, %s119
      %p126 = scmp.eq.s32.totalorder %s25, 1
      %p127 = por %p125, %p126
      %p128 = scmp.ne.s32.totalorder %s119, %s120
      %p129 = scmp.eq.s32.totalorder %s25, 0
      %p130 = por %p128, %p129
      %p131 = scmp.ne.s32.totalorder %s119, %s120
      %p132 = scmp.eq.s32.totalorder %s26, 1
      %p133 = por %p131, %p132
      %p135 = scmp.ne.s32.totalorder %s120, %s134
      %p136 = scmp.eq.s32.totalorder %s26, 0
      %p137 = por %p135, %p136
      %s139 = sadd.s32 %s138, 1
      %p142 = scmp.eq.s32.totalorder %s20, 1
      %p143 = scmp.ne.s32.totalorder %s138, %s140
      %p144 = scmp.eq.s32.totalorder %s20, 0
      %p145 = por %p143, %p144
      %p146 = scmp.ne.s32.totalorder %s138, %s140
      %p147 = scmp.eq.s32.totalorder %s25, 1
      %p148 = por %p146, %p147
      %p149 = scmp.ne.s32.totalorder %s140, %s141
      %p150 = scmp.eq.s32.totalorder %s25, 0
      %p151 = por %p149, %p150
      %p152 = scmp.ne.s32.totalorder %s140, %s141
      %p153 = scmp.eq.s32.totalorder %s26, 1
      %p154 = por %p152, %p153
      %p156 = scmp.ne.s32.totalorder %s141, %s155
      %p157 = scmp.eq.s32.totalorder %s26, 0
      %p158 = por %p156, %p157
      %s160 = sadd.s32 %s159, 1
      %p163 = scmp.eq.s32.totalorder %s20, 1
      %p164 = scmp.ne.s32.totalorder %s159, %s161
      %p165 = scmp.eq.s32.totalorder %s20, 0
      %p166 = por %p164, %p165
      %p167 = scmp.ne.s32.totalorder %s159, %s161
      %p168 = scmp.eq.s32.totalorder %s25, 1
      %p169 = por %p167, %p168
      %p170 = scmp.ne.s32.totalorder %s161, %s162
      %p171 = scmp.eq.s32.totalorder %s25, 0
      %p172 = por %p170, %p171
      %p173 = scmp.ne.s32.totalorder %s161, %s162
      %p174 = scmp.eq.s32.totalorder %s26, 1
      %p175 = por %p173, %p174
      %p177 = scmp.ne.s32.totalorder %s162, %s176
      %p178 = scmp.eq.s32.totalorder %s26, 0
      %p179 = por %p177, %p178
      %s181 = sadd.s32 %s180, 1
      %p184 = scmp.eq.s32.totalorder %s20, 1
      %p185 = scmp.ne.s32.totalorder %s180, %s182
      %p186 = scmp.eq.s32.totalorder %s20, 0
      %p187 = por %p185, %p186
      %p188 = scmp.ne.s32.totalorder %s180, %s182
      %p189 = scmp.eq.s32.totalorder %s25, 1
      %p190 = por %p188, %p189
      %p191 = scmp.ne.s32.totalorder %s182, %s183
      %p192 = scmp.eq.s32.totalorder %s25, 0
      %p193 = por %p191, %p192
      %p194 = scmp.ne.s32.totalorder %s182, %s183
      %p195 = scmp.eq.s32.totalorder %s26, 1
      %p196 = por %p194, %p195
      %p198 = scmp.ne.s32.totalorder %s183, %s197
      %p199 = scmp.eq.s32.totalorder %s26, 0
      %p200 = por %p198, %p199
      %s202 = sadd.s32 %s201, 1
      %p205 = scmp.eq.s32.totalorder %s20, 1
      %p206 = scmp.ne.s32.totalorder %s201, %s203
      %p207 = scmp.eq.s32.totalorder %s20, 0
      %p208 = por %p206, %p207
      %p209 = scmp.ne.s32.totalorder %s201, %s203
      %p210 = scmp.eq.s32.totalorder %s25, 1
      %p211 = por %p209, %p210
      %p212 = scmp.ne.s32.totalorder %s203, %s204
      %p213 = scmp.eq.s32.totalorder %s25, 0
      %p214 = por %p212, %p213
      %p215 = scmp.ne.s32.totalorder %s203, %s204
      %p216 = scmp.eq.s32.totalorder %s26, 1
      %p217 = por %p215, %p216
      %p219 = scmp.ne.s32.totalorder %s204, %s218
      %p220 = scmp.eq.s32.totalorder %s26, 0
      %p221 = por %p219, %p220
      %s223 = sadd.s32 %s222, 1
      %p226 = scmp.eq.s32.totalorder %s20, 1
      %p227 = scmp.ne.s32.totalorder %s222, %s224
      %p228 = scmp.eq.s32.totalorder %s20, 0
      %p229 = por %p227, %p228
      %p230 = scmp.ne.s32.totalorder %s222, %s224
      %p231 = scmp.eq.s32.totalorder %s25, 1
      %p232 = por %p230, %p231
      %p233 = scmp.ne.s32.totalorder %s224, %s225
      %p234 = scmp.eq.s32.totalorder %s25, 0
      %p235 = por %p233, %p234
      %p236 = scmp.ne.s32.totalorder %s224, %s225
      %p237 = scmp.eq.s32.totalorder %s26, 1
      %p238 = por %p236, %p237
      %p240 = scmp.ne.s32.totalorder %s225, %s239
      %p241 = scmp.eq.s32.totalorder %s26, 0
      %p242 = por %p240, %p241
      %s243 = ssub.s32 %s20, %s27
      %p244 = scmp.eq.s32.totalorder %s243, 0
      %s246 = sadd.s32 %s245, 1
      %s247 = scalar_select %p244, %s245, %s246
      %p250 = pneg %p244
      %p251 = scmp.eq.s32.totalorder %s20, 1
      %p252 = por %p250, %p251
      %p253 = scmp.ne.s32.totalorder %s245, %s248
      %p254 = scmp.eq.s32.totalorder %s20, 0
      %p255 = por %p253, %p254
      %p256 = scmp.ne.s32.totalorder %s245, %s248
      %p257 = scmp.eq.s32.totalorder %s25, 1
      %p258 = por %p256, %p257
      %p259 = scmp.ne.s32.totalorder %s248, %s249
      %p260 = scmp.eq.s32.totalorder %s25, 0
      %p261 = por %p259, %p260
      %p262 = scmp.ne.s32.totalorder %s248, %s249
      %p263 = scmp.eq.s32.totalorder %s26, 1
      %p264 = por %p262, %p263
      %p266 = scmp.ne.s32.totalorder %s249, %s265
      %p267 = scmp.eq.s32.totalorder %s26, 0
      %p268 = por %p266, %p267
      %p269 = scmp.le.s32.totalorder 1, %s20
      %p270 = scmp.lt.s32.totalorder %s20, 3
      %p271 = pnand %p269, %p270
      %p272 = pneg %p271
      // Predicated region
      $region9: #{_lambda_.1} parent=5 // pred_check
        _
      $region10: #{_lambda_.1} parent=5 // pred_check_branch
        %274 = sbr.rel (%p271) target = $region12
      $region11: #{_lambda_.1} parent=5 // pred_region
        %s275 = ssub.s32 %s20, 1
        // Predicated region
        $region13: #{_lambda_.1} parent=11 // pred_check
          %p276 = pneg %p67
        $region14: #{_lambda_.1} parent=11 // pred_check_branch
          %278 = sbr.rel (%p276) target = $region16
        $region15: #{_lambda_.1} parent=11 // pred_region
          _
        $region16: #{_lambda_.1} parent=11 // pred_fallthru
          _
        // Predicated region
        $region17: #{_lambda_.1} parent=11 // pred_check
          %p279 = pneg %p88
        $region18: #{_lambda_.1} parent=11 // pred_check_branch
          %281 = sbr.rel (%p279) target = $region20
        $region19: #{_lambda_.1} parent=11 // pred_region
          _
        $region20: #{_lambda_.1} parent=11 // pred_fallthru
          _
        // Predicated region
        $region21: #{_lambda_.1} parent=11 // pred_check
          %p282 = pneg %p109
        $region22: #{_lambda_.1} parent=11 // pred_check_branch
          %284 = sbr.rel (%p282) target = $region24
        $region23: #{_lambda_.1} parent=11 // pred_region
          _
        $region24: #{_lambda_.1} parent=11 // pred_fallthru
          _
        // Predicated region
        $region25: #{_lambda_.1} parent=11 // pred_check
          %p285 = pneg %p130
        $region26: #{_lambda_.1} parent=11 // pred_check_branch
          %287 = sbr.rel (%p285) target = $region28
        $region27: #{_lambda_.1} parent=11 // pred_region
          %s289 = ssub.s32 10240, 10240
          %290 = vsyncadd [#allocation3], %s289
          %s291 = sshll.u32 [#allocation2], 4
          %s292 = int_to_ptr.vmem [resolvable:$true] %s291
          %297 = dma.hbm_to_vmem [thread:$0]  %s4, 10240, %s292, [#allocation3], 128, 128, 8
        $region28: #{_lambda_.1} parent=11 // pred_fallthru
          _
        // Predicated region
        $region29: #{_lambda_.1} parent=11 // pred_check
          %p298 = pneg %p151
        $region30: #{_lambda_.1} parent=11 // pred_check_branch
          %300 = sbr.rel (%p298) target = $region32
        $region31: #{_lambda_.1} parent=11 // pred_region
          _
        $region32: #{_lambda_.1} parent=11 // pred_fallthru
          _
        // Predicated region
        $region33: #{_lambda_.1} parent=11 // pred_check
          %p301 = pneg %p172
        $region34: #{_lambda_.1} parent=11 // pred_check_branch
          %303 = sbr.rel (%p301) target = $region36
        $region35: #{_lambda_.1} parent=11 // pred_region
          _
        $region36: #{_lambda_.1} parent=11 // pred_fallthru
          _
        // Predicated region
        $region37: #{_lambda_.1} parent=11 // pred_check
          %p304 = pneg %p193
        $region38: #{_lambda_.1} parent=11 // pred_check_branch
          %306 = sbr.rel (%p304) target = $region40
        $region39: #{_lambda_.1} parent=11 // pred_region
          _
        $region40: #{_lambda_.1} parent=11 // pred_fallthru
          _
        // Predicated region
        $region41: #{_lambda_.1} parent=11 // pred_check
          %p307 = pneg %p214
        $region42: #{_lambda_.1} parent=11 // pred_check_branch
          %309 = sbr.rel (%p307) target = $region44
        $region43: #{_lambda_.1} parent=11 // pred_region
          _
        $region44: #{_lambda_.1} parent=11 // pred_fallthru
          _
        // Predicated region
        $region45: #{_lambda_.1} parent=11 // pred_check
          %p310 = pneg %p235
        $region46: #{_lambda_.1} parent=11 // pred_check_branch
          %312 = sbr.rel (%p310) target = $region48
        $region47: #{_lambda_.1} parent=11 // pred_region
          _
        $region48: #{_lambda_.1} parent=11 // pred_fallthru
          _
      $region12: #{_lambda_.1} parent=5 // pred_fallthru
        _
      %p313 = scmp.lt.s32.totalorder %s20, 2
      // Predicated region
      $region49: #{_lambda_.1} parent=5 // pred_check
        %p314 = pneg %p313
      $region50: #{_lambda_.1} parent=5 // pred_check_branch
        %316 = sbr.rel (%p314) target = $region52
      $region51: #{_lambda_.1} parent=5 // pred_region
        // Predicated region
        $region53: #{_lambda_.1} parent=51 // pred_check
          %p317 = pneg %p40
        $region54: #{_lambda_.1} parent=51 // pred_check_branch
          %319 = sbr.rel (%p317) target = $region56
        $region55: #{_lambda_.1} parent=51 // pred_region
          %p320 = scmp.lt.s32.totalorder %s20, 1
          %s321 = scalar_select %p320, %s20, 1
          %s322 = smul.addr %s321, 4
          %s323 = smul.addr %s322, 8
          %s324 = scalar_lea.vmem %s0, %s323
        $region56: #{_lambda_.1} parent=51 // pred_fallthru
          _
      $region52: #{_lambda_.1} parent=5 // pred_fallthru
        _
      %p325 = scmp.le.s32.totalorder 1, %s20
      %p326 = scmp.lt.s32.totalorder %s20, 3
      %p327 = pnand %p325, %p326
      %p328 = pneg %p327
      // Predicated region
      $region57: #{_lambda_.1} parent=5 // pred_check
        _
      $region58: #{_lambda_.1} parent=5 // pred_check_branch
        %330 = sbr.rel (%p327) target = $region60
      $region59: #{_lambda_.1} parent=5 // pred_region
        %s331 = ssub.s32 %s20, 1
        // Predicated region
        $region61: #{_lambda_.1} parent=59 // pred_check
          %p332 = pneg %p130
        $region62: #{_lambda_.1} parent=59 // pred_check_branch
          %334 = sbr.rel (%p332) target = $region64
        $region63: #{_lambda_.1} parent=59 // pred_region
          %335 = dma.done [#allocation3], 10240
        $region64: #{_lambda_.1} parent=59 // pred_fallthru
          _
        %p336 = scmp.lt.s32.totalorder %s25, 1
        %s337 = scalar_select %p336, %s25, 1
        %s338 = smul.addr %s337, 4
        %s339 = smul.addr %s338, 8
        %s340 = scalar_lea.vmem %s0, %s339
        %p341 = pneg %p46
        %p342 = pneg %p43
        %p343 = pneg %p67
        %p344 = pneg %p64
        %p345 = pneg %p88
        %p346 = pneg %p85
        %p347 = pneg %p109
        %p348 = pneg %p106
        %p349 = pneg %p130
        %p350 = pneg %p127
        %p351 = pneg %p151
        %p352 = pneg %p148
        %p353 = pneg %p172
        %p354 = pneg %p169
        %p355 = pneg %p193
        %p356 = pneg %p190
        %p357 = pneg %p214
        %p358 = pneg %p211
        %p359 = pneg %p235
        %p360 = pneg %p232
        %p361 = pneg %p261
        %p362 = pneg %p258
        %s363 = sand.u32 %s248, 1
        %s364 = scalar_lea.sflag [#allocation4], %s363
        %s365 = sand.u32 %s248, 1
        %s366 = smul.addr %s365, 2
        %s367 = scalar_lea.vmem [#allocation5], %s366
        %p368 = scmp.lt.s32.totalorder %s25, 1
        %s369 = scalar_select %p368, %s25, 1
        %s370 = smul.addr %s369, 4
        %s371 = smul.addr %s370, 8
        %s372 = scalar_lea.vmem %s0, %s371
        %v374 = vld [vmem:[%s372] sm:$0xff]
        %v375 = vld [vmem:[%s372 + $0x8] sm:$0xff]
        %v376 = vld [vmem:[%s372 + $0x10] sm:$0xff]
        %v377 = vld [vmem:[%s372 + $0x18] sm:$0xff]
        %v378 = vld [vmem:[%s1] sm:$0xff]
        %vm379 = vcmask 64512
        %v381 = vsel %vm379, %v374, 0
        %v384 = vsel %vm379, %v375, 0
        %v387 = vsel %vm379, %v376, 0
        %v390 = vsel %vm379, %v377, 0
        %392 = vmatprep.subr.mxu0 0.0
        %393 = vmatpush1.msra.mxu0 0.0
        %394 = vmatprep.subr.mxu0 0.0
        %395 = vmatpush1.msra.mxu0 0.0
        %396 = vmatprep.subr.mxu0 0.0
        %397 = vmatpush1.msra.mxu0 0.0
        %398 = vmatprep.subr.mxu0 0.0
        %399 = vmatpush1.msra.mxu0 0.0
        %400 = vmatprep.subr.mxu0 0.0
        %401 = vmatpush1.msra.mxu0 0.0
        %402 = vmatprep.subr.mxu0 0.0
        %403 = vmatpush1.msra.mxu0 0.0
        %404 = vmatprep.subr.mxu0 0.0
        %405 = vmatpush1.msra.mxu0 0.0
        %406 = vmatprep.subr.mxu0 0.0
        %407 = vmatpush1.msra.mxu0 0.0
        %408 = vmatprep.subr.mxu0 0.0
        %409 = vmatpush1.msra.mxu0 0.0
        %410 = vmatprep.subr.mxu0 0.0
        %411 = vmatpush1.msra.mxu0 0.0
        %412 = vmatprep.subr.mxu0 0.0
        %413 = vmatpush1.msra.mxu0 0.0
        %414 = vmatprep.subr.mxu0 0.0
        %415 = vmatpush1.msra.mxu0 0.0
        %416 = vmatprep.subr.mxu0 0.0
        %417 = vmatpush1.msra.mxu0 0.0
        %418 = vmatprep.subr.mxu0 0.0
        %419 = vmatpush1.msra.mxu0 0.0
        %420 = vmatprep.subr.mxu0 0.0
        %421 = vmatpush1.msra.mxu0 0.0
        %422 = vmatprep.subr.mxu0 0.0
        %423 = vmatpush1.msra.mxu0 %v378
        %424 = vmatprep.subr.mxu0 0.0
        %425 = vmatpush2.msra.mxu0 0.0
        %426 = vmatprep.subr.mxu0 0.0
        %427 = vmatpush2.msra.mxu0 0.0
        %428 = vmatprep.subr.mxu0 0.0
        %429 = vmatpush2.msra.mxu0 0.0
        %430 = vmatprep.subr.mxu0 0.0
        %431 = vmatpush2.msra.mxu0 0.0
        %432 = vmatprep.subr.mxu0 0.0
        %433 = vmatpush2.msra.mxu0 0.0
        %434 = vmatprep.subr.mxu0 0.0
        %435 = vmatpush2.msra.mxu0 0.0
        %436 = vmatprep.subr.mxu0 0.0
        %437 = vmatpush2.msra.mxu0 0.0
        %438 = vmatprep.subr.mxu0 0.0
        %439 = vmatpush2.msra.mxu0 0.0
        %440 = vmatprep.subr.mxu0 0.0
        %441 = vmatpush2.msra.mxu0 0.0
        %442 = vmatprep.subr.mxu0 0.0
        %443 = vmatpush2.msra.mxu0 0.0
        %444 = vmatprep.subr.mxu0 0.0
        %445 = vmatpush2.msra.mxu0 0.0
        %446 = vmatprep.subr.mxu0 0.0
        %447 = vmatpush2.msra.mxu0 0.0
        %448 = vmatprep.subr.mxu0 0.0
        %449 = vmatpush2.msra.mxu0 0.0
        %450 = vmatprep.subr.mxu0 0.0
        %451 = vmatpush2.msra.mxu0 0.0
        %452 = vmatprep.subr.mxu0 0.0
        %453 = vmatpush2.msra.mxu0 0.0
        %454 = vmatprep.subr.mxu0 0.0
        %455 = vmatpush2.msra.mxu0 0.0
        %456 = vmatprep.mubr.f32.mxu0 0.0
        %457 = vmatmul.mubr.f32.gmra.mxu0 %v381
        %v458 = vpop.f32.mrf.mxu0
        %v459 = vadd.f32 0.0, %v458
        %v460 = vpop.f32.mrf.mxu0
        %461 = vmatprep.mubr.f32.mxu0 0.0
        %462 = vmatmul.mubr.f32.gmra.mxu0 %v384
        %v463 = vpop.f32.mrf.mxu0
        %v464 = vadd.f32 0.0, %v463
        %v465 = vpop.f32.mrf.mxu0
        %466 = vmatprep.mubr.f32.mxu0 0.0
        %467 = vmatmul.mubr.f32.gmra.mxu0 %v387
        %v468 = vpop.f32.mrf.mxu0
        %v469 = vadd.f32 0.0, %v468
        %v470 = vpop.f32.mrf.mxu0
        %471 = vmatprep.mubr.f32.mxu0 0.0
        %472 = vmatmul.mubr.f32.gmra.mxu0 %v390
        %v473 = vpop.f32.mrf.mxu0
        %v474 = vadd.f32 0.0, %v473
        %v475 = vpop.f32.mrf.mxu0
        %476 = vdwg.mxu0
        %v477 = vld [vmem:[%s2] sm:$0x1]
        %v479 = vlaneseq
        %v480 = vshrl.u32 %v479, 7
        %v481 = vsub.s32 0, %v480
        %v482 = vrot.slane %v477, %v481
        %v484 = vmul.f32 %v459, %v482
        %v485 = vmul.f32 %v464, %v482
        %v486 = vmul.f32 %v469, %v482
        %v487 = vmul.f32 %v474, %v482
        %v488 = vld [vmem:[%s3] sm:$0x1]
        %v490 = vlaneseq
        %v491 = vshrl.u32 %v490, 7
        %v492 = vsub.s32 0, %v491
        %v493 = vrot.slane %v488, %v492
        %v495 = vadd.f32 %v484, %v493
        %v496 = vadd.f32 %v485, %v493
        %v497 = vadd.f32 %v486, %v493
        %v498 = vadd.f32 %v487, %v493
        %v499 = vmax.f32 %v495, 0.0
        %v500 = vmax.f32 %v496, 0.0
        %v501 = vmax.f32 %v497, 0.0
        %v502 = vmax.f32 %v498, 0.0
        %v503 = vpack.c.bf16 %v500, %v499
        %v504 = vpack.c.bf16 %v502, %v501
        %vm505 = vsmask.f32 7424
        %v507 = vshrl.u32 %v503, 16
        %v509 = vshll.u32 %v503, 16
        %v511 = vrot.slane %v509, 1
        %v512 = vor.u32 %v507, %v511
        %v514 = vshll.u32 %v504, 16
        %v516 = vrot.slane %v514, 1
        %v517 = vsel %vm505, %v512, %v516
        %v518 = vshrl.u32 %v504, 16
        %v520 = vor.u32 %v518, %v516
        %vm523 = vcmask 1047552
        %vm524 = vmand %vm523, %vm505
        %v525 = vsel %vm524, %v520, 0
        %vm528 = vcmask 1046528
        %v529 = vrot.slane %v503, 1
        %v530 = vrot.slane %v504, 1
        %v531 = vsel %vm528, %v529, %v530
        %vm533 = vcmask 1046528
        %v536 = vsel %vm533, %v530, 0
        %vm538 = vsmask.f32 6400
        %v539 = vrot.slane %v507, 1
        %v540 = vrot.slane %v509, 2
        %v541 = vor.u32 %v539, %v540
        %v542 = vrot.slane %v518, 1
        %v543 = vrot.slane %v514, 2
        %v544 = vor.u32 %v542, %v543
        %v545 = vsel %vm538, %v541, %v544
        %vm548 = vmand %vm528, %vm538
        %v549 = vsel %vm548, %v544, 0
        %vm550 = vcmask 1045504
        %v551 = vrot.slane %v503, 2
        %v552 = vrot.slane %v504, 2
        %v553 = vsel %vm550, %v551, %v552
        %vm555 = vcmask 1045504
        %v557 = vsel %vm555, %v552, 0
        %v559 = vld [vmem:[#allocation2] sm:$0xff]
        %v560 = vld [vmem:[#allocation2 + $0x8] sm:$0xff]
        %v561 = vld [vmem:[#allocation2 + $0x10] sm:$0xff]
        %v562 = vld [vmem:[#allocation2 + $0x18] sm:$0xff]
        %v563 = vld [vmem:[#allocation2 + $0x20] sm:$0xff]
        %v564 = vld [vmem:[#allocation2 + $0x28] sm:$0xff]
        %v565 = vld [vmem:[#allocation2 + $0x30] sm:$0xff]
        %v566 = vld [vmem:[#allocation2 + $0x38] sm:$0xff]
        %v567 = vld [vmem:[#allocation2 + $0x40] sm:$0xff]
        %v568 = vld [vmem:[#allocation2 + $0x48] sm:$0xff]
        %v569 = vld [vmem:[#allocation2 + $0x50] sm:$0xff]
        %v570 = vld [vmem:[#allocation2 + $0x58] sm:$0xff]
        %v571 = vld [vmem:[#allocation2 + $0x60] sm:$0xff]
        %v572 = vld [vmem:[#allocation2 + $0x68] sm:$0xff]
        %v573 = vld [vmem:[#allocation2 + $0x70] sm:$0xff]
        %v574 = vld [vmem:[#allocation2 + $0x78] sm:$0xff]
        %v575 = vld [vmem:[#allocation2 + $0x80] sm:$0xff]
        %v576 = vld [vmem:[#allocation2 + $0x88] sm:$0xff]
        %v577 = vld [vmem:[#allocation2 + $0x90] sm:$0xff]
        %v578 = vld [vmem:[#allocation2 + $0x98] sm:$0xff]
        %v579 = vld [vmem:[#allocation2 + $0xa0] sm:$0xff]
        %v580 = vld [vmem:[#allocation2 + $0xa8] sm:$0xff]
        %v581 = vld [vmem:[#allocation2 + $0xb0] sm:$0xff]
        %v582 = vld [vmem:[#allocation2 + $0xb8] sm:$0xff]
        %v583 = vld [vmem:[#allocation2 + $0xc0] sm:$0xff]
        %v584 = vld [vmem:[#allocation2 + $0xc8] sm:$0xff]
        %v585 = vld [vmem:[#allocation2 + $0xd0] sm:$0xff]
        %v586 = vld [vmem:[#allocation2 + $0xd8] sm:$0xff]
        %v587 = vld [vmem:[#allocation2 + $0xe0] sm:$0xff]
        %v588 = vld [vmem:[#allocation2 + $0xe8] sm:$0xff]
        %v589 = vld [vmem:[#allocation2 + $0xf0] sm:$0xff]
        %v590 = vld [vmem:[#allocation2 + $0xf8] sm:$0xff]
        %v591 = vld [vmem:[#allocation2 + $0x100] sm:$0xff]
        %v592 = vld [vmem:[#allocation2 + $0x108] sm:$0xff]
        %v593 = vld [vmem:[#allocation2 + $0x110] sm:$0xff]
        %v594 = vld [vmem:[#allocation2 + $0x118] sm:$0xff]
        %v595 = vld [vmem:[#allocation2 + $0x120] sm:$0xff]
        %v596 = vld [vmem:[#allocation2 + $0x128] sm:$0xff]
        %v597 = vld [vmem:[#allocation2 + $0x130] sm:$0xff]
        %v598 = vld [vmem:[#allocation2 + $0x138] sm:$0xff]
        %v599 = vld [vmem:[#allocation2 + $0x140] sm:$0xff]
        %v600 = vld [vmem:[#allocation2 + $0x148] sm:$0xff]
        %v601 = vld [vmem:[#allocation2 + $0x150] sm:$0xff]
        %v602 = vld [vmem:[#allocation2 + $0x158] sm:$0xff]
        %v603 = vld [vmem:[#allocation2 + $0x160] sm:$0xff]
        %v604 = vld [vmem:[#allocation2 + $0x168] sm:$0xff]
        %v605 = vld [vmem:[#allocation2 + $0x170] sm:$0xff]
        %v606 = vld [vmem:[#allocation2 + $0x178] sm:$0xff]
        %v607 = vld [vmem:[#allocation2 + $0x180] sm:$0xff]
        %v608 = vld [vmem:[#allocation2 + $0x188] sm:$0xff]
        %v609 = vld [vmem:[#allocation2 + $0x190] sm:$0xff]
        %v610 = vld [vmem:[#allocation2 + $0x198] sm:$0xff]
        %v611 = vld [vmem:[#allocation2 + $0x1a0] sm:$0xff]
        %v612 = vld [vmem:[#allocation2 + $0x1a8] sm:$0xff]
        %v613 = vld [vmem:[#allocation2 + $0x1b0] sm:$0xff]
        %v614 = vld [vmem:[#allocation2 + $0x1b8] sm:$0xff]
        %v615 = vld [vmem:[#allocation2 + $0x1c0] sm:$0xff]
        %v616 = vld [vmem:[#allocation2 + $0x1c8] sm:$0xff]
        %v617 = vld [vmem:[#allocation2 + $0x1d0] sm:$0xff]
        %v618 = vld [vmem:[#allocation2 + $0x1d8] sm:$0xff]
        %v619 = vld [vmem:[#allocation2 + $0x1e0] sm:$0xff]
        %v620 = vld [vmem:[#allocation2 + $0x1e8] sm:$0xff]
        %v621 = vld [vmem:[#allocation2 + $0x1f0] sm:$0xff]
        %v622 = vld [vmem:[#allocation2 + $0x1f8] sm:$0xff]
        %v623 = vld [vmem:[#allocation2 + $0x200] sm:$0xff]
        %v624 = vld [vmem:[#allocation2 + $0x208] sm:$0xff]
        %v625 = vld [vmem:[#allocation2 + $0x210] sm:$0xff]
        %v626 = vld [vmem:[#allocation2 + $0x218] sm:$0xff]
        %v627 = vld [vmem:[#allocation2 + $0x220] sm:$0xff]
        %v628 = vld [vmem:[#allocation2 + $0x228] sm:$0xff]
        %v629 = vld [vmem:[#allocation2 + $0x230] sm:$0xff]
        %v630 = vld [vmem:[#allocation2 + $0x238] sm:$0xff]
        %v631 = vld [vmem:[#allocation2 + $0x240] sm:$0xff]
        %v632 = vld [vmem:[#allocation2 + $0x248] sm:$0xff]
        %v633 = vld [vmem:[#allocation2 + $0x250] sm:$0xff]
        %v634 = vld [vmem:[#allocation2 + $0x258] sm:$0xff]
        %v635 = vld [vmem:[#allocation2 + $0x260] sm:$0xff]
        %v636 = vld [vmem:[#allocation2 + $0x268] sm:$0xff]
        %v637 = vld [vmem:[#allocation2 + $0x270] sm:$0xff]
        %v638 = vld [vmem:[#allocation2 + $0x278] sm:$0xff]
        %v719 = vunpack.c.l.b16 %v559
        %v720 = vunpack.c.h.b16 %v559
        %v721 = vunpack.c.l.b16 %v560
        %v722 = vunpack.c.h.b16 %v560
        %v723 = vunpack.c.l.b16 %v561
        %v724 = vunpack.c.h.b16 %v561
        %v725 = vunpack.c.l.b16 %v562
        %v726 = vunpack.c.h.b16 %v562
        %v727 = vunpack.c.l.b16 %v563
        %v728 = vunpack.c.h.b16 %v563
        %v729 = vunpack.c.l.b16 %v564
        %v730 = vunpack.c.h.b16 %v564
        %v731 = vunpack.c.l.b16 %v565
        %v732 = vunpack.c.h.b16 %v565
        %v733 = vunpack.c.l.b16 %v566
        %v734 = vunpack.c.h.b16 %v566
        %v735 = vunpack.c.l.b16 %v567
        %v736 = vunpack.c.h.b16 %v567
        %v737 = vunpack.c.l.b16 %v568
        %v738 = vunpack.c.h.b16 %v568
        %v739 = vunpack.c.l.b16 %v569
        %v740 = vunpack.c.h.b16 %v569
        %v741 = vunpack.c.l.b16 %v570
        %v742 = vunpack.c.h.b16 %v570
        %v743 = vunpack.c.l.b16 %v571
        %v744 = vunpack.c.h.b16 %v571
        %v745 = vunpack.c.l.b16 %v572
        %v746 = vunpack.c.h.b16 %v572
        %v747 = vunpack.c.l.b16 %v573
        %v748 = vunpack.c.h.b16 %v573
        %v749 = vunpack.c.l.b16 %v574
        %v750 = vunpack.c.h.b16 %v574
        %v751 = vunpack.c.l.b16 %v575
        %v752 = vunpack.c.h.b16 %v575
        %v753 = vunpack.c.l.b16 %v576
        %v754 = vunpack.c.h.b16 %v576
        %v755 = vunpack.c.l.b16 %v577
        %v756 = vunpack.c.h.b16 %v577
        %v757 = vunpack.c.l.b16 %v578
        %v758 = vunpack.c.h.b16 %v578
        %v759 = vunpack.c.l.b16 %v579
        %v760 = vunpack.c.h.b16 %v579
        %v761 = vunpack.c.l.b16 %v580
        %v762 = vunpack.c.h.b16 %v580
        %v763 = vunpack.c.l.b16 %v581
        %v764 = vunpack.c.h.b16 %v581
        %v765 = vunpack.c.l.b16 %v582
        %v766 = vunpack.c.h.b16 %v582
        %v767 = vunpack.c.l.b16 %v583
        %v768 = vunpack.c.h.b16 %v583
        %v769 = vunpack.c.l.b16 %v584
        %v770 = vunpack.c.h.b16 %v584
        %v771 = vunpack.c.l.b16 %v585
        %v772 = vunpack.c.h.b16 %v585
        %v773 = vunpack.c.l.b16 %v586
        %v774 = vunpack.c.h.b16 %v586
        %v775 = vunpack.c.l.b16 %v587
        %v776 = vunpack.c.h.b16 %v587
        %v777 = vunpack.c.l.b16 %v588
        %v778 = vunpack.c.h.b16 %v588
        %v779 = vunpack.c.l.b16 %v589
        %v780 = vunpack.c.h.b16 %v589
        %v781 = vunpack.c.l.b16 %v590
        %v782 = vunpack.c.h.b16 %v590
        %v783 = vunpack.c.l.b16 %v591
        %v784 = vunpack.c.h.b16 %v591
        %v785 = vunpack.c.l.b16 %v592
        %v786 = vunpack.c.h.b16 %v592
        %v787 = vunpack.c.l.b16 %v593
        %v788 = vunpack.c.h.b16 %v593
        %v789 = vunpack.c.l.b16 %v594
        %v790 = vunpack.c.h.b16 %v594
        %v791 = vunpack.c.l.b16 %v595
        %v792 = vunpack.c.h.b16 %v595
        %v793 = vunpack.c.l.b16 %v596
        %v794 = vunpack.c.h.b16 %v596
        %v795 = vunpack.c.l.b16 %v597
        %v796 = vunpack.c.h.b16 %v597
        %v797 = vunpack.c.l.b16 %v598
        %v798 = vunpack.c.h.b16 %v598
        %v799 = vunpack.c.l.b16 %v599
        %v800 = vunpack.c.h.b16 %v599
        %v801 = vunpack.c.l.b16 %v600
        %v802 = vunpack.c.h.b16 %v600
        %v803 = vunpack.c.l.b16 %v601
        %v804 = vunpack.c.h.b16 %v601
        %v805 = vunpack.c.l.b16 %v602
        %v806 = vunpack.c.h.b16 %v602
        %v807 = vunpack.c.l.b16 %v603
        %v808 = vunpack.c.h.b16 %v603
        %v809 = vunpack.c.l.b16 %v604
        %v810 = vunpack.c.h.b16 %v604
        %v811 = vunpack.c.l.b16 %v605
        %v812 = vunpack.c.h.b16 %v605
        %v813 = vunpack.c.l.b16 %v606
        %v814 = vunpack.c.h.b16 %v606
        %v815 = vunpack.c.l.b16 %v607
        %v816 = vunpack.c.h.b16 %v607
        %v817 = vunpack.c.l.b16 %v608
        %v818 = vunpack.c.h.b16 %v608
        %v819 = vunpack.c.l.b16 %v609
        %v820 = vunpack.c.h.b16 %v609
        %v821 = vunpack.c.l.b16 %v610
        %v822 = vunpack.c.h.b16 %v610
        %v823 = vunpack.c.l.b16 %v611
        %v824 = vunpack.c.h.b16 %v611
        %v825 = vunpack.c.l.b16 %v612
        %v826 = vunpack.c.h.b16 %v612
        %v827 = vunpack.c.l.b16 %v613
        %v828 = vunpack.c.h.b16 %v613
        %v829 = vunpack.c.l.b16 %v614
        %v830 = vunpack.c.h.b16 %v614
        %v831 = vunpack.c.l.b16 %v615
        %v832 = vunpack.c.h.b16 %v615
        %v833 = vunpack.c.l.b16 %v616
        %v834 = vunpack.c.h.b16 %v616
        %v835 = vunpack.c.l.b16 %v617
        %v836 = vunpack.c.h.b16 %v617
        %v837 = vunpack.c.l.b16 %v618
        %v838 = vunpack.c.h.b16 %v618
        %v839 = vunpack.c.l.b16 %v619
        %v840 = vunpack.c.h.b16 %v619
        %v841 = vunpack.c.l.b16 %v620
        %v842 = vunpack.c.h.b16 %v620
        %v843 = vunpack.c.l.b16 %v621
        %v844 = vunpack.c.h.b16 %v621
        %v845 = vunpack.c.l.b16 %v622
        %v846 = vunpack.c.h.b16 %v622
        %v847 = vunpack.c.l.b16 %v623
        %v848 = vunpack.c.h.b16 %v623
        %v849 = vunpack.c.l.b16 %v624
        %v850 = vunpack.c.h.b16 %v624
        %v851 = vunpack.c.l.b16 %v625
        %v852 = vunpack.c.h.b16 %v625
        %v853 = vunpack.c.l.b16 %v626
        %v854 = vunpack.c.h.b16 %v626
        %v855 = vunpack.c.l.b16 %v627
        %v856 = vunpack.c.h.b16 %v627
        %v857 = vunpack.c.l.b16 %v628
        %v858 = vunpack.c.h.b16 %v628
        %v859 = vunpack.c.l.b16 %v629
        %v860 = vunpack.c.h.b16 %v629
        %v861 = vunpack.c.l.b16 %v630
        %v862 = vunpack.c.h.b16 %v630
        %v863 = vunpack.c.l.b16 %v631
        %v864 = vunpack.c.h.b16 %v631
        %v865 = vunpack.c.l.b16 %v632
        %v866 = vunpack.c.h.b16 %v632
        %v867 = vunpack.c.l.b16 %v633
        %v868 = vunpack.c.h.b16 %v633
        %v869 = vunpack.c.l.b16 %v634
        %v870 = vunpack.c.h.b16 %v634
        %v871 = vunpack.c.l.b16 %v635
        %v872 = vunpack.c.h.b16 %v635
        %v873 = vunpack.c.l.b16 %v636
        %v874 = vunpack.c.h.b16 %v636
        %v875 = vunpack.c.l.b16 %v637
        %v876 = vunpack.c.h.b16 %v637
        %v877 = vunpack.c.l.b16 %v638
        %v878 = vunpack.c.h.b16 %v638
        %v879 = vpack.c.b16 %v721, %v719
        %v880 = vpack.c.b16 %v722, %v720
        %v881 = vpack.c.b16 %v725, %v723
        %v882 = vpack.c.b16 %v726, %v724
        %v883 = vpack.c.b16 %v729, %v727
        %v884 = vpack.c.b16 %v730, %v728
        %v885 = vpack.c.b16 %v733, %v731
        %v886 = vpack.c.b16 %v734, %v732
        %v887 = vpack.c.b16 %v737, %v735
        %v888 = vpack.c.b16 %v738, %v736
        %v889 = vpack.c.b16 %v741, %v739
        %v890 = vpack.c.b16 %v742, %v740
        %v891 = vpack.c.b16 %v745, %v743
        %v892 = vpack.c.b16 %v746, %v744
        %v893 = vpack.c.b16 %v749, %v747
        %v894 = vpack.c.b16 %v750, %v748
        %v895 = vpack.c.b16 %v753, %v751
        %v896 = vpack.c.b16 %v754, %v752
        %v897 = vpack.c.b16 %v757, %v755
        %v898 = vpack.c.b16 %v758, %v756
        %v899 = vpack.c.b16 %v761, %v759
        %v900 = vpack.c.b16 %v762, %v760
        %v901 = vpack.c.b16 %v765, %v763
        %v902 = vpack.c.b16 %v766, %v764
        %v903 = vpack.c.b16 %v769, %v767
        %v904 = vpack.c.b16 %v770, %v768
        %v905 = vpack.c.b16 %v773, %v771
        %v906 = vpack.c.b16 %v774, %v772
        %v907 = vpack.c.b16 %v777, %v775
        %v908 = vpack.c.b16 %v778, %v776
        %v909 = vpack.c.b16 %v781, %v779
        %v910 = vpack.c.b16 %v782, %v780
        %v911 = vpack.c.b16 %v785, %v783
        %v912 = vpack.c.b16 %v786, %v784
        %v913 = vpack.c.b16 %v789, %v787
        %v914 = vpack.c.b16 %v790, %v788
        %v915 = vpack.c.b16 %v793, %v791
        %v916 = vpack.c.b16 %v794, %v792
        %v917 = vpack.c.b16 %v797, %v795
        %v918 = vpack.c.b16 %v798, %v796
        %v919 = vpack.c.b16 %v801, %v799
        %v920 = vpack.c.b16 %v802, %v800
        %v921 = vpack.c.b16 %v805, %v803
        %v922 = vpack.c.b16 %v806, %v804
        %v923 = vpack.c.b16 %v809, %v807
        %v924 = vpack.c.b16 %v810, %v808
        %v925 = vpack.c.b16 %v813, %v811
        %v926 = vpack.c.b16 %v814, %v812
        %v927 = vpack.c.b16 %v817, %v815
        %v928 = vpack.c.b16 %v818, %v816
        %v929 = vpack.c.b16 %v821, %v819
        %v930 = vpack.c.b16 %v822, %v820
        %v931 = vpack.c.b16 %v825, %v823
        %v932 = vpack.c.b16 %v826, %v824
        %v933 = vpack.c.b16 %v829, %v827
        %v934 = vpack.c.b16 %v830, %v828
        %v935 = vpack.c.b16 %v833, %v831
        %v936 = vpack.c.b16 %v834, %v832
        %v937 = vpack.c.b16 %v837, %v835
        %v938 = vpack.c.b16 %v838, %v836
        %v939 = vpack.c.b16 %v841, %v839
        %v940 = vpack.c.b16 %v842, %v840
        %v941 = vpack.c.b16 %v845, %v843
        %v942 = vpack.c.b16 %v846, %v844
        %v943 = vpack.c.b16 %v849, %v847
        %v944 = vpack.c.b16 %v850, %v848
        %v945 = vpack.c.b16 %v853, %v851
        %v946 = vpack.c.b16 %v854, %v852
        %v947 = vpack.c.b16 %v857, %v855
        %v948 = vpack.c.b16 %v858, %v856
        %v949 = vpack.c.b16 %v861, %v859
        %v950 = vpack.c.b16 %v862, %v860
        %v951 = vpack.c.b16 %v865, %v863
        %v952 = vpack.c.b16 %v866, %v864
        %v953 = vpack.c.b16 %v869, %v867
        %v954 = vpack.c.b16 %v870, %v868
        %v955 = vpack.c.b16 %v873, %v871
        %v956 = vpack.c.b16 %v874, %v872
        %v957 = vpack.c.b16 %v877, %v875
        %v958 = vpack.c.b16 %v878, %v876
        %1039 = vmatprep.subr.bf16.mxu0 %v894
        %1040 = vmatpush1.bf16.msra.mxu0 %v893
        %1041 = vmatprep.subr.bf16.mxu0 %v892
        %1042 = vmatpush1.bf16.msra.mxu0 %v891
        %1043 = vmatprep.subr.bf16.mxu0 %v890
        %1044 = vmatpush1.bf16.msra.mxu0 %v889
        %1045 = vmatprep.subr.bf16.mxu0 %v888
        %1046 = vmatpush1.bf16.msra.mxu0 %v887
        %1047 = vmatprep.subr.bf16.mxu0 %v886
        %1048 = vmatpush1.bf16.msra.mxu0 %v885
        %1049 = vmatprep.subr.bf16.mxu0 %v884
        %1050 = vmatpush1.bf16.msra.mxu0 %v883
        %1051 = vmatprep.subr.bf16.mxu0 %v882
        %1052 = vmatpush1.bf16.msra.mxu0 %v881
        %1053 = vmatprep.subr.bf16.mxu0 %v880
        %1054 = vmatpush1.bf16.msra.mxu0 %v879
        %1055 = vmatprep.subr.bf16.mxu0 %v910
        %1056 = vmatpush2.bf16.msra.mxu0 %v909
        %1057 = vmatprep.subr.bf16.mxu0 %v908
        %1058 = vmatpush2.bf16.msra.mxu0 %v907
        %1059 = vmatprep.subr.bf16.mxu0 %v906
        %1060 = vmatpush2.bf16.msra.mxu0 %v905
        %1061 = vmatprep.subr.bf16.mxu0 %v904
        %1062 = vmatpush2.bf16.msra.mxu0 %v903
        %1063 = vmatprep.subr.bf16.mxu0 %v902
        %1064 = vmatpush2.bf16.msra.mxu0 %v901
        %1065 = vmatprep.subr.bf16.mxu0 %v900
        %1066 = vmatpush2.bf16.msra.mxu0 %v899
        %1067 = vmatprep.subr.bf16.mxu0 %v898
        %1068 = vmatpush2.bf16.msra.mxu0 %v897
        %1069 = vmatprep.subr.bf16.mxu0 %v896
        %1070 = vmatpush2.bf16.msra.mxu0 %v895
        %1071 = vmatprep.mubr.bf16.mxu0 %v517
        %1072 = vmatmul.mubr.bf16.gmra.mxu0 %v503
        %v1073 = vpop.f32.mrf.mxu0
        %v1074 = vadd.f32 0.0, %v1073
        %v1075 = vpop.f32.mrf.mxu0
        %v1076 = vadd.f32 0.0, %v1075
        %v1077 = vpop.f32.mrf.mxu0
        %v1078 = vadd.f32 0.0, %v1077
        %v1079 = vpop.f32.mrf.mxu0
        %v1080 = vadd.f32 0.0, %v1079
        %1081 = vmatprep.mubr.bf16.mxu0 %v525
        %1082 = vmatmul.mubr.bf16.gmra.mxu0 %v504
        %v1083 = vpop.f32.mrf.mxu0
        %v1084 = vadd.f32 0.0, %v1083
        %v1085 = vpop.f32.mrf.mxu0
        %v1086 = vadd.f32 0.0, %v1085
        %v1087 = vpop.f32.mrf.mxu0
        %v1088 = vadd.f32 0.0, %v1087
        %v1089 = vpop.f32.mrf.mxu0
        %v1090 = vadd.f32 0.0, %v1089
        %1091 = vdwg.mxu0
        %1092 = vmatprep.subr.bf16.mxu0 %v926
        %1093 = vmatpush1.bf16.msra.mxu0 %v925
        %1094 = vmatprep.subr.bf16.mxu0 %v924
        %1095 = vmatpush1.bf16.msra.mxu0 %v923
        %1096 = vmatprep.subr.bf16.mxu0 %v922
        %1097 = vmatpush1.bf16.msra.mxu0 %v921
        %1098 = vmatprep.subr.bf16.mxu0 %v920
        %1099 = vmatpush1.bf16.msra.mxu0 %v919
        %1100 = vmatprep.subr.bf16.mxu0 %v918
        %1101 = vmatpush1.bf16.msra.mxu0 %v917
        %1102 = vmatprep.subr.bf16.mxu0 %v916
        %1103 = vmatpush1.bf16.msra.mxu0 %v915
        %1104 = vmatprep.subr.bf16.mxu0 %v914
        %1105 = vmatpush1.bf16.msra.mxu0 %v913
        %1106 = vmatprep.subr.bf16.mxu0 %v912
        %1107 = vmatpush1.bf16.msra.mxu0 %v911
        %1108 = vmatprep.subr.bf16.mxu0 %v942
        %1109 = vmatpush2.bf16.msra.mxu0 %v941
        %1110 = vmatprep.subr.bf16.mxu0 %v940
        %1111 = vmatpush2.bf16.msra.mxu0 %v939
        %1112 = vmatprep.subr.bf16.mxu0 %v938
        %1113 = vmatpush2.bf16.msra.mxu0 %v937
        %1114 = vmatprep.subr.bf16.mxu0 %v936
        %1115 = vmatpush2.bf16.msra.mxu0 %v935
        %1116 = vmatprep.subr.bf16.mxu0 %v934
        %1117 = vmatpush2.bf16.msra.mxu0 %v933
        %1118 = vmatprep.subr.bf16.mxu0 %v932
        %1119 = vmatpush2.bf16.msra.mxu0 %v931
        %1120 = vmatprep.subr.bf16.mxu0 %v930
        %1121 = vmatpush2.bf16.msra.mxu0 %v929
        %1122 = vmatprep.subr.bf16.mxu0 %v928
        %1123 = vmatpush2.bf16.msra.mxu0 %v927
        %1124 = vmatprep.mubr.bf16.mxu0 %v545
        %1125 = vmatmul.mubr.bf16.gmra.mxu0 %v531
        %v1126 = vpop.f32.mrf.mxu0
        %v1127 = vadd.f32 %v1074, %v1126
        %v1128 = vpop.f32.mrf.mxu0
        %v1129 = vadd.f32 %v1076, %v1128
        %v1130 = vpop.f32.mrf.mxu0
        %v1131 = vadd.f32 %v1078, %v1130
        %v1132 = vpop.f32.mrf.mxu0
        %v1133 = vadd.f32 %v1080, %v1132
        %1134 = vmatprep.mubr.bf16.mxu0 %v549
        %1135 = vmatmul.mubr.bf16.gmra.mxu0 %v536
        %v1136 = vpop.f32.mrf.mxu0
        %v1137 = vadd.f32 %v1084, %v1136
        %v1138 = vpop.f32.mrf.mxu0
        %v1139 = vadd.f32 %v1086, %v1138
        %v1140 = vpop.f32.mrf.mxu0
        %v1141 = vadd.f32 %v1088, %v1140
        %v1142 = vpop.f32.mrf.mxu0
        %v1143 = vadd.f32 %v1090, %v1142
        %1144 = vdwg.mxu0
        %1145 = vmatprep.subr.bf16.mxu0 %v958
        %1146 = vmatpush1.bf16.msra.mxu0 %v957
        %1147 = vmatprep.subr.bf16.mxu0 %v956
        %1148 = vmatpush1.bf16.msra.mxu0 %v955
        %1149 = vmatprep.subr.bf16.mxu0 %v954
        %1150 = vmatpush1.bf16.msra.mxu0 %v953
        %1151 = vmatprep.subr.bf16.mxu0 %v952
        %1152 = vmatpush1.bf16.msra.mxu0 %v951
        %1153 = vmatprep.subr.bf16.mxu0 %v950
        %1154 = vmatpush1.bf16.msra.mxu0 %v949
        %1155 = vmatprep.subr.bf16.mxu0 %v948
        %1156 = vmatpush1.bf16.msra.mxu0 %v947
        %1157 = vmatprep.subr.bf16.mxu0 %v946
        %1158 = vmatpush1.bf16.msra.mxu0 %v945
        %1159 = vmatprep.subr.bf16.mxu0 %v944
        %1160 = vmatpush1.bf16.msra.mxu0 %v943
        %1161 = vmatprep.subr.bf16.mxu0 0
        %1162 = vmatpush2.bf16.msra.mxu0 0
        %1163 = vmatprep.subr.bf16.mxu0 0
        %1164 = vmatpush2.bf16.msra.mxu0 0
        %1165 = vmatprep.subr.bf16.mxu0 0
        %1166 = vmatpush2.bf16.msra.mxu0 0
        %1167 = vmatprep.subr.bf16.mxu0 0
        %1168 = vmatpush2.bf16.msra.mxu0 0
        %1169 = vmatprep.subr.bf16.mxu0 0
        %1170 = vmatpush2.bf16.msra.mxu0 0
        %1171 = vmatprep.subr.bf16.mxu0 0
        %1172 = vmatpush2.bf16.msra.mxu0 0
        %1173 = vmatprep.subr.bf16.mxu0 0
        %1174 = vmatpush2.bf16.msra.mxu0 0
        %1175 = vmatprep.subr.bf16.mxu0 0
        %1176 = vmatpush2.bf16.msra.mxu0 0
        %1177 = vmatprep.mubr.bf16.mxu0 0
        %1178 = vmatmul.mubr.bf16.gmra.mxu0 %v553
        %v1179 = vpop.f32.mrf.mxu0
        %v1180 = vadd.f32 %v1127, %v1179
        %v1181 = vpop.f32.mrf.mxu0
        %v1182 = vadd.f32 %v1129, %v1181
        %v1183 = vpop.f32.mrf.mxu0
        %v1184 = vadd.f32 %v1131, %v1183
        %v1185 = vpop.f32.mrf.mxu0
        %v1186 = vadd.f32 %v1133, %v1185
        %1187 = vmatprep.mubr.bf16.mxu0 0
        %1188 = vmatmul.mubr.bf16.gmra.mxu0 %v557
        %v1189 = vpop.f32.mrf.mxu0
        %v1190 = vadd.f32 %v1137, %v1189
        %v1191 = vpop.f32.mrf.mxu0
        %v1192 = vadd.f32 %v1139, %v1191
        %v1193 = vpop.f32.mrf.mxu0
        %v1194 = vadd.f32 %v1141, %v1193
        %v1195 = vpop.f32.mrf.mxu0
        %v1196 = vadd.f32 %v1143, %v1195
        %1197 = vdwg.mxu0
        %v1198 = vld [vmem:[%s5] sm:$0x3]
        %v1200 = vlaneseq
        %v1201 = vshrl.u32 %v1200, 7
        %v1202 = vsub.s32 0, %v1201
        %v1203 = vrot.slane %v1198, %v1202
        %v1204 = vlaneseq
        %v1205 = vshrl.u32 %v1204, 7
        %v1206 = vsub.s32 1, %v1205
        %v1207 = vrot.slane %v1198, %v1206
        %v1210 = vmul.f32 %v1180, %v1203
        %v1211 = vmul.f32 %v1182, %v1207
        %v1212 = vmul.f32 %v1184, %v1203
        %v1213 = vmul.f32 %v1186, %v1207
        %v1214 = vmul.f32 %v1190, %v1203
        %v1215 = vmul.f32 %v1192, %v1207
        %v1216 = vmul.f32 %v1194, %v1203
        %v1217 = vmul.f32 %v1196, %v1207
        %v1218 = vld [vmem:[%s6] sm:$0x3]
        %v1220 = vlaneseq
        %v1221 = vshrl.u32 %v1220, 7
        %v1222 = vsub.s32 0, %v1221
        %v1223 = vrot.slane %v1218, %v1222
        %v1224 = vlaneseq
        %v1225 = vshrl.u32 %v1224, 7
        %v1226 = vsub.s32 1, %v1225
        %v1227 = vrot.slane %v1218, %v1226
        %v1230 = vadd.f32 %v1210, %v1223
        %v1231 = vadd.f32 %v1211, %v1227
        %v1232 = vadd.f32 %v1212, %v1223
        %v1233 = vadd.f32 %v1213, %v1227
        %v1234 = vadd.f32 %v1214, %v1223
        %v1235 = vadd.f32 %v1215, %v1227
        %v1236 = vadd.f32 %v1216, %v1223
        %v1237 = vadd.f32 %v1217, %v1227
        %v1238 = vmax.f32 %v1230, 0.0
        %v1239 = vmax.f32 %v1231, 0.0
        %v1240 = vmax.f32 %v1232, 0.0
        %v1241 = vmax.f32 %v1233, 0.0
        %v1242 = vmax.f32 %v1234, 0.0
        %v1243 = vmax.f32 %v1235, 0.0
        %v1244 = vmax.f32 %v1236, 0.0
        %v1245 = vmax.f32 %v1237, 0.0
        %v1246 = vpack.c.bf16 %v1240, %v1238
        %v1247 = vpack.c.bf16 %v1241, %v1239
        %v1248 = vpack.c.bf16 %v1244, %v1242
        %v1249 = vpack.c.bf16 %v1245, %v1243
        %v1251 = vshrl.u32 %v1246, 16
        %v1253 = vshll.u32 %v1246, 16
        %v1255 = vrot.slane %v1253, 1
        %v1256 = vor.u32 %v1251, %v1255
        %v1258 = vshll.u32 %v1248, 16
        %v1260 = vrot.slane %v1258, 1
        %v1261 = vsel %vm505, %v1256, %v1260
        %v1263 = vshrl.u32 %v1247, 16
        %v1265 = vshll.u32 %v1247, 16
        %v1267 = vrot.slane %v1265, 1
        %v1268 = vor.u32 %v1263, %v1267
        %v1270 = vshll.u32 %v1249, 16
        %v1272 = vrot.slane %v1270, 1
        %v1273 = vsel %vm505, %v1268, %v1272
        %v1274 = vshrl.u32 %v1248, 16
        %v1276 = vor.u32 %v1274, %v1260
        %v1277 = vshrl.u32 %v1249, 16
        %v1279 = vor.u32 %v1277, %v1272
        %v1284 = vsel %vm524, %v1276, 0
        %v1285 = vsel %vm524, %v1279, 0
        %v1290 = vrot.slane %v1246, 1
        %v1291 = vrot.slane %v1248, 1
        %v1292 = vsel %vm528, %v1290, %v1291
        %v1293 = vrot.slane %v1247, 1
        %v1294 = vrot.slane %v1249, 1
        %v1295 = vsel %vm528, %v1293, %v1294
        %v1299 = vsel %vm533, %v1291, 0
        %v1302 = vsel %vm533, %v1294, 0
        %v1304 = vld [vmem:[%s7] sm:$0xff]
        %v1305 = vld [vmem:[%s7 + $0x8] sm:$0xff]
        %v1306 = vld [vmem:[%s7 + $0x10] sm:$0xff]
        %v1307 = vld [vmem:[%s7 + $0x18] sm:$0xff]
        %v1308 = vld [vmem:[%s7 + $0x20] sm:$0xff]
        %v1309 = vld [vmem:[%s7 + $0x28] sm:$0xff]
        %v1310 = vld [vmem:[%s7 + $0x30] sm:$0xff]
        %v1311 = vld [vmem:[%s7 + $0x38] sm:$0xff]
        %v1312 = vld [vmem:[%s7 + $0x40] sm:$0xff]
        %v1313 = vld [vmem:[%s7 + $0x48] sm:$0xff]
        %v1314 = vld [vmem:[%s7 + $0x50] sm:$0xff]
        %v1315 = vld [vmem:[%s7 + $0x58] sm:$0xff]
        %v1316 = vld [vmem:[%s7 + $0x60] sm:$0xff]
        %v1317 = vld [vmem:[%s7 + $0x68] sm:$0xff]
        %v1318 = vld [vmem:[%s7 + $0x70] sm:$0xff]
        %v1319 = vld [vmem:[%s7 + $0x78] sm:$0xff]
        %v1320 = vld [vmem:[%s7 + $0x80] sm:$0xff]
        %v1321 = vld [vmem:[%s7 + $0x88] sm:$0xff]
        %v1322 = vld [vmem:[%s7 + $0x90] sm:$0xff]
        %v1323 = vld [vmem:[%s7 + $0x98] sm:$0xff]
        %v1324 = vld [vmem:[%s7 + $0xa0] sm:$0xff]
        %v1325 = vld [vmem:[%s7 + $0xa8] sm:$0xff]
        %v1326 = vld [vmem:[%s7 + $0xb0] sm:$0xff]
        %v1327 = vld [vmem:[%s7 + $0xb8] sm:$0xff]
        %v1328 = vld [vmem:[%s7 + $0xc0] sm:$0xff]
        %v1329 = vld [vmem:[%s7 + $0xc8] sm:$0xff]
        %v1330 = vld [vmem:[%s7 + $0xd0] sm:$0xff]
        %v1331 = vld [vmem:[%s7 + $0xd8] sm:$0xff]
        %v1332 = vld [vmem:[%s7 + $0xe0] sm:$0xff]
        %v1333 = vld [vmem:[%s7 + $0xe8] sm:$0xff]
        %v1334 = vld [vmem:[%s7 + $0xf0] sm:$0xff]
        %v1335 = vld [vmem:[%s7 + $0xf8] sm:$0xff]
        %v1336 = vld [vmem:[%s7 + $0x100] sm:$0xff]
        %v1337 = vld [vmem:[%s7 + $0x108] sm:$0xff]
        %v1338 = vld [vmem:[%s7 + $0x110] sm:$0xff]
        %v1339 = vld [vmem:[%s7 + $0x118] sm:$0xff]
        %v1340 = vld [vmem:[%s7 + $0x120] sm:$0xff]
        %v1341 = vld [vmem:[%s7 + $0x128] sm:$0xff]
        %v1342 = vld [vmem:[%s7 + $0x130] sm:$0xff]
        %v1343 = vld [vmem:[%s7 + $0x138] sm:$0xff]
        %v1344 = vld [vmem:[%s7 + $0x140] sm:$0xff]
        %v1345 = vld [vmem:[%s7 + $0x148] sm:$0xff]
        %v1346 = vld [vmem:[%s7 + $0x150] sm:$0xff]
        %v1347 = vld [vmem:[%s7 + $0x158] sm:$0xff]
        %v1348 = vld [vmem:[%s7 + $0x160] sm:$0xff]
        %v1349 = vld [vmem:[%s7 + $0x168] sm:$0xff]
        %v1350 = vld [vmem:[%s7 + $0x170] sm:$0xff]
        %v1351 = vld [vmem:[%s7 + $0x178] sm:$0xff]
        %v1352 = vld [vmem:[%s7 + $0x180] sm:$0xff]
        %v1353 = vld [vmem:[%s7 + $0x188] sm:$0xff]
        %v1354 = vld [vmem:[%s7 + $0x190] sm:$0xff]
        %v1355 = vld [vmem:[%s7 + $0x198] sm:$0xff]
        %v1356 = vld [vmem:[%s7 + $0x1a0] sm:$0xff]
        %v1357 = vld [vmem:[%s7 + $0x1a8] sm:$0xff]
        %v1358 = vld [vmem:[%s7 + $0x1b0] sm:$0xff]
        %v1359 = vld [vmem:[%s7 + $0x1b8] sm:$0xff]
        %v1360 = vld [vmem:[%s7 + $0x1c0] sm:$0xff]
        %v1361 = vld [vmem:[%s7 + $0x1c8] sm:$0xff]
        %v1362 = vld [vmem:[%s7 + $0x1d0] sm:$0xff]
        %v1363 = vld [vmem:[%s7 + $0x1d8] sm:$0xff]
        %v1364 = vld [vmem:[%s7 + $0x1e0] sm:$0xff]
        %v1365 = vld [vmem:[%s7 + $0x1e8] sm:$0xff]
        %v1366 = vld [vmem:[%s7 + $0x1f0] sm:$0xff]
        %v1367 = vld [vmem:[%s7 + $0x1f8] sm:$0xff]
        %v1368 = vld [vmem:[%s7 + $0x200] sm:$0xff]
        %v1369 = vld [vmem:[%s7 + $0x208] sm:$0xff]
        %v1370 = vld [vmem:[%s7 + $0x210] sm:$0xff]
        %v1371 = vld [vmem:[%s7 + $0x218] sm:$0xff]
        %v1372 = vld [vmem:[%s7 + $0x220] sm:$0xff]
        %v1373 = vld [vmem:[%s7 + $0x228] sm:$0xff]
        %v1374 = vld [vmem:[%s7 + $0x230] sm:$0xff]
        %v1375 = vld [vmem:[%s7 + $0x238] sm:$0xff]
        %v1376 = vld [vmem:[%s7 + $0x240] sm:$0xff]
        %v1377 = vld [vmem:[%s7 + $0x248] sm:$0xff]
        %v1378 = vld [vmem:[%s7 + $0x250] sm:$0xff]
        %v1379 = vld [vmem:[%s7 + $0x258] sm:$0xff]
        %v1380 = vld [vmem:[%s7 + $0x260] sm:$0xff]
        %v1381 = vld [vmem:[%s7 + $0x268] sm:$0xff]
        %v1382 = vld [vmem:[%s7 + $0x270] sm:$0xff]
        %v1383 = vld [vmem:[%s7 + $0x278] sm:$0xff]
        %v1384 = vld [vmem:[%s7 + $0x280] sm:$0xff]
        %v1385 = vld [vmem:[%s7 + $0x288] sm:$0xff]
        %v1386 = vld [vmem:[%s7 + $0x290] sm:$0xff]
        %v1387 = vld [vmem:[%s7 + $0x298] sm:$0xff]
        %v1388 = vld [vmem:[%s7 + $0x2a0] sm:$0xff]
        %v1389 = vld [vmem:[%s7 + $0x2a8] sm:$0xff]
        %v1390 = vld [vmem:[%s7 + $0x2b0] sm:$0xff]
        %v1391 = vld [vmem:[%s7 + $0x2b8] sm:$0xff]
        %v1392 = vld [vmem:[%s7 + $0x2c0] sm:$0xff]
        %v1393 = vld [vmem:[%s7 + $0x2c8] sm:$0xff]
        %v1394 = vld [vmem:[%s7 + $0x2d0] sm:$0xff]
        %v1395 = vld [vmem:[%s7 + $0x2d8] sm:$0xff]
        %v1396 = vld [vmem:[%s7 + $0x2e0] sm:$0xff]
        %v1397 = vld [vmem:[%s7 + $0x2e8] sm:$0xff]
        %v1398 = vld [vmem:[%s7 + $0x2f0] sm:$0xff]
        %v1399 = vld [vmem:[%s7 + $0x2f8] sm:$0xff]
        %v1496 = vunpack.c.l.b16 %v1304
        %v1497 = vunpack.c.h.b16 %v1304
        %v1498 = vunpack.c.l.b16 %v1305
        %v1499 = vunpack.c.h.b16 %v1305
        %v1500 = vunpack.c.l.b16 %v1306
        %v1501 = vunpack.c.h.b16 %v1306
        %v1502 = vunpack.c.l.b16 %v1307
        %v1503 = vunpack.c.h.b16 %v1307
        %v1504 = vunpack.c.l.b16 %v1308
        %v1505 = vunpack.c.h.b16 %v1308
        %v1506 = vunpack.c.l.b16 %v1309
        %v1507 = vunpack.c.h.b16 %v1309
        %v1508 = vunpack.c.l.b16 %v1310
        %v1509 = vunpack.c.h.b16 %v1310
        %v1510 = vunpack.c.l.b16 %v1311
        %v1511 = vunpack.c.h.b16 %v1311
        %v1512 = vunpack.c.l.b16 %v1312
        %v1513 = vunpack.c.h.b16 %v1312
        %v1514 = vunpack.c.l.b16 %v1313
        %v1515 = vunpack.c.h.b16 %v1313
        %v1516 = vunpack.c.l.b16 %v1314
        %v1517 = vunpack.c.h.b16 %v1314
        %v1518 = vunpack.c.l.b16 %v1315
        %v1519 = vunpack.c.h.b16 %v1315
        %v1520 = vunpack.c.l.b16 %v1316
        %v1521 = vunpack.c.h.b16 %v1316
        %v1522 = vunpack.c.l.b16 %v1317
        %v1523 = vunpack.c.h.b16 %v1317
        %v1524 = vunpack.c.l.b16 %v1318
        %v1525 = vunpack.c.h.b16 %v1318
        %v1526 = vunpack.c.l.b16 %v1319
        %v1527 = vunpack.c.h.b16 %v1319
        %v1528 = vunpack.c.l.b16 %v1320
        %v1529 = vunpack.c.h.b16 %v1320
        %v1530 = vunpack.c.l.b16 %v1321
        %v1531 = vunpack.c.h.b16 %v1321
        %v1532 = vunpack.c.l.b16 %v1322
        %v1533 = vunpack.c.h.b16 %v1322
        %v1534 = vunpack.c.l.b16 %v1323
        %v1535 = vunpack.c.h.b16 %v1323
        %v1536 = vunpack.c.l.b16 %v1324
        %v1537 = vunpack.c.h.b16 %v1324
        %v1538 = vunpack.c.l.b16 %v1325
        %v1539 = vunpack.c.h.b16 %v1325
        %v1540 = vunpack.c.l.b16 %v1326
        %v1541 = vunpack.c.h.b16 %v1326
        %v1542 = vunpack.c.l.b16 %v1327
        %v1543 = vunpack.c.h.b16 %v1327
        %v1544 = vunpack.c.l.b16 %v1328
        %v1545 = vunpack.c.h.b16 %v1328
        %v1546 = vunpack.c.l.b16 %v1329
        %v1547 = vunpack.c.h.b16 %v1329
        %v1548 = vunpack.c.l.b16 %v1330
        %v1549 = vunpack.c.h.b16 %v1330
        %v1550 = vunpack.c.l.b16 %v1331
        %v1551 = vunpack.c.h.b16 %v1331
        %v1552 = vunpack.c.l.b16 %v1332
        %v1553 = vunpack.c.h.b16 %v1332
        %v1554 = vunpack.c.l.b16 %v1333
        %v1555 = vunpack.c.h.b16 %v1333
        %v1556 = vunpack.c.l.b16 %v1334
        %v1557 = vunpack.c.h.b16 %v1334
        %v1558 = vunpack.c.l.b16 %v1335
        %v1559 = vunpack.c.h.b16 %v1335
        %v1560 = vunpack.c.l.b16 %v1336
        %v1561 = vunpack.c.h.b16 %v1336
        %v1562 = vunpack.c.l.b16 %v1337
        %v1563 = vunpack.c.h.b16 %v1337
        %v1564 = vunpack.c.l.b16 %v1338
        %v1565 = vunpack.c.h.b16 %v1338
        %v1566 = vunpack.c.l.b16 %v1339
        %v1567 = vunpack.c.h.b16 %v1339
        %v1568 = vunpack.c.l.b16 %v1340
        %v1569 = vunpack.c.h.b16 %v1340
        %v1570 = vunpack.c.l.b16 %v1341
        %v1571 = vunpack.c.h.b16 %v1341
        %v1572 = vunpack.c.l.b16 %v1342
        %v1573 = vunpack.c.h.b16 %v1342
        %v1574 = vunpack.c.l.b16 %v1343
        %v1575 = vunpack.c.h.b16 %v1343
        %v1576 = vunpack.c.l.b16 %v1344
        %v1577 = vunpack.c.h.b16 %v1344
        %v1578 = vunpack.c.l.b16 %v1345
        %v1579 = vunpack.c.h.b16 %v1345
        %v1580 = vunpack.c.l.b16 %v1346
        %v1581 = vunpack.c.h.b16 %v1346
        %v1582 = vunpack.c.l.b16 %v1347
        %v1583 = vunpack.c.h.b16 %v1347
        %v1584 = vunpack.c.l.b16 %v1348
        %v1585 = vunpack.c.h.b16 %v1348
        %v1586 = vunpack.c.l.b16 %v1349
        %v1587 = vunpack.c.h.b16 %v1349
        %v1588 = vunpack.c.l.b16 %v1350
        %v1589 = vunpack.c.h.b16 %v1350
        %v1590 = vunpack.c.l.b16 %v1351
        %v1591 = vunpack.c.h.b16 %v1351
        %v1592 = vunpack.c.l.b16 %v1352
        %v1593 = vunpack.c.h.b16 %v1352
        %v1594 = vunpack.c.l.b16 %v1353
        %v1595 = vunpack.c.h.b16 %v1353
        %v1596 = vunpack.c.l.b16 %v1354
        %v1597 = vunpack.c.h.b16 %v1354
        %v1598 = vunpack.c.l.b16 %v1355
        %v1599 = vunpack.c.h.b16 %v1355
        %v1600 = vunpack.c.l.b16 %v1356
        %v1601 = vunpack.c.h.b16 %v1356
        %v1602 = vunpack.c.l.b16 %v1357
        %v1603 = vunpack.c.h.b16 %v1357
        %v1604 = vunpack.c.l.b16 %v1358
        %v1605 = vunpack.c.h.b16 %v1358
        %v1606 = vunpack.c.l.b16 %v1359
        %v1607 = vunpack.c.h.b16 %v1359
        %v1608 = vunpack.c.l.b16 %v1360
        %v1609 = vunpack.c.h.b16 %v1360
        %v1610 = vunpack.c.l.b16 %v1361
        %v1611 = vunpack.c.h.b16 %v1361
        %v1612 = vunpack.c.l.b16 %v1362
        %v1613 = vunpack.c.h.b16 %v1362
        %v1614 = vunpack.c.l.b16 %v1363
        %v1615 = vunpack.c.h.b16 %v1363
        %v1616 = vunpack.c.l.b16 %v1364
        %v1617 = vunpack.c.h.b16 %v1364
        %v1618 = vunpack.c.l.b16 %v1365
        %v1619 = vunpack.c.h.b16 %v1365
        %v1620 = vunpack.c.l.b16 %v1366
        %v1621 = vunpack.c.h.b16 %v1366
        %v1622 = vunpack.c.l.b16 %v1367
        %v1623 = vunpack.c.h.b16 %v1367
        %v1624 = vunpack.c.l.b16 %v1368
        %v1625 = vunpack.c.h.b16 %v1368
        %v1626 = vunpack.c.l.b16 %v1369
        %v1627 = vunpack.c.h.b16 %v1369
        %v1628 = vunpack.c.l.b16 %v1370
        %v1629 = vunpack.c.h.b16 %v1370
        %v1630 = vunpack.c.l.b16 %v1371
        %v1631 = vunpack.c.h.b16 %v1371
        %v1632 = vunpack.c.l.b16 %v1372
        %v1633 = vunpack.c.h.b16 %v1372
        %v1634 = vunpack.c.l.b16 %v1373
        %v1635 = vunpack.c.h.b16 %v1373
        %v1636 = vunpack.c.l.b16 %v1374
        %v1637 = vunpack.c.h.b16 %v1374
        %v1638 = vunpack.c.l.b16 %v1375
        %v1639 = vunpack.c.h.b16 %v1375
        %v1640 = vunpack.c.l.b16 %v1376
        %v1641 = vunpack.c.h.b16 %v1376
        %v1642 = vunpack.c.l.b16 %v1377
        %v1643 = vunpack.c.h.b16 %v1377
        %v1644 = vunpack.c.l.b16 %v1378
        %v1645 = vunpack.c.h.b16 %v1378
        %v1646 = vunpack.c.l.b16 %v1379
        %v1647 = vunpack.c.h.b16 %v1379
        %v1648 = vunpack.c.l.b16 %v1380
        %v1649 = vunpack.c.h.b16 %v1380
        %v1650 = vunpack.c.l.b16 %v1381
        %v1651 = vunpack.c.h.b16 %v1381
        %v1652 = vunpack.c.l.b16 %v1382
        %v1653 = vunpack.c.h.b16 %v1382
        %v1654 = vunpack.c.l.b16 %v1383
        %v1655 = vunpack.c.h.b16 %v1383
        %v1656 = vunpack.c.l.b16 %v1384
        %v1657 = vunpack.c.h.b16 %v1384
        %v1658 = vunpack.c.l.b16 %v1385
        %v1659 = vunpack.c.h.b16 %v1385
        %v1660 = vunpack.c.l.b16 %v1386
        %v1661 = vunpack.c.h.b16 %v1386
        %v1662 = vunpack.c.l.b16 %v1387
        %v1663 = vunpack.c.h.b16 %v1387
        %v1664 = vunpack.c.l.b16 %v1388
        %v1665 = vunpack.c.h.b16 %v1388
        %v1666 = vunpack.c.l.b16 %v1389
        %v1667 = vunpack.c.h.b16 %v1389
        %v1668 = vunpack.c.l.b16 %v1390
        %v1669 = vunpack.c.h.b16 %v1390
        %v1670 = vunpack.c.l.b16 %v1391
        %v1671 = vunpack.c.h.b16 %v1391
        %v1672 = vunpack.c.l.b16 %v1392
        %v1673 = vunpack.c.h.b16 %v1392
        %v1674 = vunpack.c.l.b16 %v1393
        %v1675 = vunpack.c.h.b16 %v1393
        %v1676 = vunpack.c.l.b16 %v1394
        %v1677 = vunpack.c.h.b16 %v1394
        %v1678 = vunpack.c.l.b16 %v1395
        %v1679 = vunpack.c.h.b16 %v1395
        %v1680 = vunpack.c.l.b16 %v1396
        %v1681 = vunpack.c.h.b16 %v1396
        %v1682 = vunpack.c.l.b16 %v1397
        %v1683 = vunpack.c.h.b16 %v1397
        %v1684 = vunpack.c.l.b16 %v1398
        %v1685 = vunpack.c.h.b16 %v1398
        %v1686 = vunpack.c.l.b16 %v1399
        %v1687 = vunpack.c.h.b16 %v1399
        %v1688 = vpack.c.b16 %v1498, %v1496
        %v1689 = vpack.c.b16 %v1499, %v1497
        %v1690 = vpack.c.b16 %v1502, %v1500
        %v1691 = vpack.c.b16 %v1503, %v1501
        %v1692 = vpack.c.b16 %v1506, %v1504
        %v1693 = vpack.c.b16 %v1507, %v1505
        %v1694 = vpack.c.b16 %v1510, %v1508
        %v1695 = vpack.c.b16 %v1511, %v1509
        %v1696 = vpack.c.b16 %v1514, %v1512
        %v1697 = vpack.c.b16 %v1515, %v1513
        %v1698 = vpack.c.b16 %v1518, %v1516
        %v1699 = vpack.c.b16 %v1519, %v1517
        %v1700 = vpack.c.b16 %v1522, %v1520
        %v1701 = vpack.c.b16 %v1523, %v1521
        %v1702 = vpack.c.b16 %v1526, %v1524
        %v1703 = vpack.c.b16 %v1527, %v1525
        %v1704 = vpack.c.b16 %v1530, %v1528
        %v1705 = vpack.c.b16 %v1531, %v1529
        %v1706 = vpack.c.b16 %v1534, %v1532
        %v1707 = vpack.c.b16 %v1535, %v1533
        %v1708 = vpack.c.b16 %v1538, %v1536
        %v1709 = vpack.c.b16 %v1539, %v1537
        %v1710 = vpack.c.b16 %v1542, %v1540
        %v1711 = vpack.c.b16 %v1543, %v1541
        %v1712 = vpack.c.b16 %v1546, %v1544
        %v1713 = vpack.c.b16 %v1547, %v1545
        %v1714 = vpack.c.b16 %v1550, %v1548
        %v1715 = vpack.c.b16 %v1551, %v1549
        %v1716 = vpack.c.b16 %v1554, %v1552
        %v1717 = vpack.c.b16 %v1555, %v1553
        %v1718 = vpack.c.b16 %v1558, %v1556
        %v1719 = vpack.c.b16 %v1559, %v1557
        %v1720 = vpack.c.b16 %v1562, %v1560
        %v1721 = vpack.c.b16 %v1563, %v1561
        %v1722 = vpack.c.b16 %v1566, %v1564
        %v1723 = vpack.c.b16 %v1567, %v1565
        %v1724 = vpack.c.b16 %v1570, %v1568
        %v1725 = vpack.c.b16 %v1571, %v1569
        %v1726 = vpack.c.b16 %v1574, %v1572
        %v1727 = vpack.c.b16 %v1575, %v1573
        %v1728 = vpack.c.b16 %v1578, %v1576
        %v1729 = vpack.c.b16 %v1579, %v1577
        %v1730 = vpack.c.b16 %v1582, %v1580
        %v1731 = vpack.c.b16 %v1583, %v1581
        %v1732 = vpack.c.b16 %v1586, %v1584
        %v1733 = vpack.c.b16 %v1587, %v1585
        %v1734 = vpack.c.b16 %v1590, %v1588
        %v1735 = vpack.c.b16 %v1591, %v1589
        %v1736 = vpack.c.b16 %v1594, %v1592
        %v1737 = vpack.c.b16 %v1595, %v1593
        %v1738 = vpack.c.b16 %v1598, %v1596
        %v1739 = vpack.c.b16 %v1599, %v1597
        %v1740 = vpack.c.b16 %v1602, %v1600
        %v1741 = vpack.c.b16 %v1603, %v1601
        %v1742 = vpack.c.b16 %v1606, %v1604
        %v1743 = vpack.c.b16 %v1607, %v1605
        %v1744 = vpack.c.b16 %v1610, %v1608
        %v1745 = vpack.c.b16 %v1611, %v1609
        %v1746 = vpack.c.b16 %v1614, %v1612
        %v1747 = vpack.c.b16 %v1615, %v1613
        %v1748 = vpack.c.b16 %v1618, %v1616
        %v1749 = vpack.c.b16 %v1619, %v1617
        %v1750 = vpack.c.b16 %v1622, %v1620
        %v1751 = vpack.c.b16 %v1623, %v1621
        %v1752 = vpack.c.b16 %v1626, %v1624
        %v1753 = vpack.c.b16 %v1627, %v1625
        %v1754 = vpack.c.b16 %v1630, %v1628
        %v1755 = vpack.c.b16 %v1631, %v1629
        %v1756 = vpack.c.b16 %v1634, %v1632
        %v1757 = vpack.c.b16 %v1635, %v1633
        %v1758 = vpack.c.b16 %v1638, %v1636
        %v1759 = vpack.c.b16 %v1639, %v1637
        %v1760 = vpack.c.b16 %v1642, %v1640
        %v1761 = vpack.c.b16 %v1643, %v1641
        %v1762 = vpack.c.b16 %v1646, %v1644
        %v1763 = vpack.c.b16 %v1647, %v1645
        %v1764 = vpack.c.b16 %v1650, %v1648
        %v1765 = vpack.c.b16 %v1651, %v1649
        %v1766 = vpack.c.b16 %v1654, %v1652
        %v1767 = vpack.c.b16 %v1655, %v1653
        %v1768 = vpack.c.b16 %v1658, %v1656
        %v1769 = vpack.c.b16 %v1659, %v1657
        %v1770 = vpack.c.b16 %v1662, %v1660
        %v1771 = vpack.c.b16 %v1663, %v1661
        %v1772 = vpack.c.b16 %v1666, %v1664
        %v1773 = vpack.c.b16 %v1667, %v1665
        %v1774 = vpack.c.b16 %v1670, %v1668
        %v1775 = vpack.c.b16 %v1671, %v1669
        %v1776 = vpack.c.b16 %v1674, %v1672
        %v1777 = vpack.c.b16 %v1675, %v1673
        %v1778 = vpack.c.b16 %v1678, %v1676
        %v1779 = vpack.c.b16 %v1679, %v1677
        %v1780 = vpack.c.b16 %v1682, %v1680
        %v1781 = vpack.c.b16 %v1683, %v1681
        %v1782 = vpack.c.b16 %v1686, %v1684
        %v1783 = vpack.c.b16 %v1687, %v1685
        %1880 = vmatprep.subr.bf16.mxu0 %v1703
        %1881 = vmatpush1.bf16.msra.mxu0 %v1702
        %1882 = vmatprep.subr.bf16.mxu0 %v1701
        %1883 = vmatpush1.bf16.msra.mxu0 %v1700
        %1884 = vmatprep.subr.bf16.mxu0 %v1699
        %1885 = vmatpush1.bf16.msra.mxu0 %v1698
        %1886 = vmatprep.subr.bf16.mxu0 %v1697
        %1887 = vmatpush1.bf16.msra.mxu0 %v1696
        %1888 = vmatprep.subr.bf16.mxu0 %v1695
        %1889 = vmatpush1.bf16.msra.mxu0 %v1694
        %1890 = vmatprep.subr.bf16.mxu0 %v1693
        %1891 = vmatpush1.bf16.msra.mxu0 %v1692
        %1892 = vmatprep.subr.bf16.mxu0 %v1691
        %1893 = vmatpush1.bf16.msra.mxu0 %v1690
        %1894 = vmatprep.subr.bf16.mxu0 %v1689
        %1895 = vmatpush1.bf16.msra.mxu0 %v1688
        %1896 = vmatprep.subr.bf16.mxu0 %v1719
        %1897 = vmatpush2.bf16.msra.mxu0 %v1718
        %1898 = vmatprep.subr.bf16.mxu0 %v1717
        %1899 = vmatpush2.bf16.msra.mxu0 %v1716
        %1900 = vmatprep.subr.bf16.mxu0 %v1715
        %1901 = vmatpush2.bf16.msra.mxu0 %v1714
        %1902 = vmatprep.subr.bf16.mxu0 %v1713
        %1903 = vmatpush2.bf16.msra.mxu0 %v1712
        %1904 = vmatprep.subr.bf16.mxu0 %v1711
        %1905 = vmatpush2.bf16.msra.mxu0 %v1710
        %1906 = vmatprep.subr.bf16.mxu0 %v1709
        %1907 = vmatpush2.bf16.msra.mxu0 %v1708
        %1908 = vmatprep.subr.bf16.mxu0 %v1707
        %1909 = vmatpush2.bf16.msra.mxu0 %v1706
        %1910 = vmatprep.subr.bf16.mxu0 %v1705
        %1911 = vmatpush2.bf16.msra.mxu0 %v1704
        %1912 = vmatprep.mubr.bf16.mxu0 %v1247
        %1913 = vmatmul.mubr.bf16.gmra.mxu0 %v1246
        %v1914 = vpop.f32.mrf.mxu0
        %v1915 = vadd.f32 0.0, %v1914
        %v1916 = vpop.f32.mrf.mxu0
        %v1917 = vadd.f32 0.0, %v1916
        %v1918 = vpop.f32.mrf.mxu0
        %v1919 = vadd.f32 0.0, %v1918
        %v1920 = vpop.f32.mrf.mxu0
        %v1921 = vadd.f32 0.0, %v1920
        %1922 = vmatprep.mubr.bf16.mxu0 %v1249
        %1923 = vmatmul.mubr.bf16.gmra.mxu0 %v1248
        %v1924 = vpop.f32.mrf.mxu0
        %v1925 = vadd.f32 0.0, %v1924
        %v1926 = vpop.f32.mrf.mxu0
        %v1927 = vadd.f32 0.0, %v1926
        %v1928 = vpop.f32.mrf.mxu0
        %v1929 = vadd.f32 0.0, %v1928
        %v1930 = vpop.f32.mrf.mxu0
        %v1931 = vadd.f32 0.0, %v1930
        %1932 = vdwg.mxu0
        %1933 = vmatprep.subr.bf16.mxu0 %v1735
        %1934 = vmatpush1.bf16.msra.mxu0 %v1734
        %1935 = vmatprep.subr.bf16.mxu0 %v1733
        %1936 = vmatpush1.bf16.msra.mxu0 %v1732
        %1937 = vmatprep.subr.bf16.mxu0 %v1731
        %1938 = vmatpush1.bf16.msra.mxu0 %v1730
        %1939 = vmatprep.subr.bf16.mxu0 %v1729
        %1940 = vmatpush1.bf16.msra.mxu0 %v1728
        %1941 = vmatprep.subr.bf16.mxu0 %v1727
        %1942 = vmatpush1.bf16.msra.mxu0 %v1726
        %1943 = vmatprep.subr.bf16.mxu0 %v1725
        %1944 = vmatpush1.bf16.msra.mxu0 %v1724
        %1945 = vmatprep.subr.bf16.mxu0 %v1723
        %1946 = vmatpush1.bf16.msra.mxu0 %v1722
        %1947 = vmatprep.subr.bf16.mxu0 %v1721
        %1948 = vmatpush1.bf16.msra.mxu0 %v1720
        %1949 = vmatprep.subr.bf16.mxu0 %v1751
        %1950 = vmatpush2.bf16.msra.mxu0 %v1750
        %1951 = vmatprep.subr.bf16.mxu0 %v1749
        %1952 = vmatpush2.bf16.msra.mxu0 %v1748
        %1953 = vmatprep.subr.bf16.mxu0 %v1747
        %1954 = vmatpush2.bf16.msra.mxu0 %v1746
        %1955 = vmatprep.subr.bf16.mxu0 %v1745
        %1956 = vmatpush2.bf16.msra.mxu0 %v1744
        %1957 = vmatprep.subr.bf16.mxu0 %v1743
        %1958 = vmatpush2.bf16.msra.mxu0 %v1742
        %1959 = vmatprep.subr.bf16.mxu0 %v1741
        %1960 = vmatpush2.bf16.msra.mxu0 %v1740
        %1961 = vmatprep.subr.bf16.mxu0 %v1739
        %1962 = vmatpush2.bf16.msra.mxu0 %v1738
        %1963 = vmatprep.subr.bf16.mxu0 %v1737
        %1964 = vmatpush2.bf16.msra.mxu0 %v1736
        %1965 = vmatprep.mubr.bf16.mxu0 %v1273
        %1966 = vmatmul.mubr.bf16.gmra.mxu0 %v1261
        %v1967 = vpop.f32.mrf.mxu0
        %v1968 = vadd.f32 %v1915, %v1967
        %v1969 = vpop.f32.mrf.mxu0
        %v1970 = vadd.f32 %v1917, %v1969
        %v1971 = vpop.f32.mrf.mxu0
        %v1972 = vadd.f32 %v1919, %v1971
        %v1973 = vpop.f32.mrf.mxu0
        %v1974 = vadd.f32 %v1921, %v1973
        %1975 = vmatprep.mubr.bf16.mxu0 %v1285
        %1976 = vmatmul.mubr.bf16.gmra.mxu0 %v1284
        %v1977 = vpop.f32.mrf.mxu0
        %v1978 = vadd.f32 %v1925, %v1977
        %v1979 = vpop.f32.mrf.mxu0
        %v1980 = vadd.f32 %v1927, %v1979
        %v1981 = vpop.f32.mrf.mxu0
        %v1982 = vadd.f32 %v1929, %v1981
        %v1983 = vpop.f32.mrf.mxu0
        %v1984 = vadd.f32 %v1931, %v1983
        %1985 = vdwg.mxu0
        %1986 = vmatprep.subr.bf16.mxu0 %v1767
        %1987 = vmatpush1.bf16.msra.mxu0 %v1766
        %1988 = vmatprep.subr.bf16.mxu0 %v1765
        %1989 = vmatpush1.bf16.msra.mxu0 %v1764
        %1990 = vmatprep.subr.bf16.mxu0 %v1763
        %1991 = vmatpush1.bf16.msra.mxu0 %v1762
        %1992 = vmatprep.subr.bf16.mxu0 %v1761
        %1993 = vmatpush1.bf16.msra.mxu0 %v1760
        %1994 = vmatprep.subr.bf16.mxu0 %v1759
        %1995 = vmatpush1.bf16.msra.mxu0 %v1758
        %1996 = vmatprep.subr.bf16.mxu0 %v1757
        %1997 = vmatpush1.bf16.msra.mxu0 %v1756
        %1998 = vmatprep.subr.bf16.mxu0 %v1755
        %1999 = vmatpush1.bf16.msra.mxu0 %v1754
        %2000 = vmatprep.subr.bf16.mxu0 %v1753
        %2001 = vmatpush1.bf16.msra.mxu0 %v1752
        %2002 = vmatprep.subr.bf16.mxu0 %v1783
        %2003 = vmatpush2.bf16.msra.mxu0 %v1782
        %2004 = vmatprep.subr.bf16.mxu0 %v1781
        %2005 = vmatpush2.bf16.msra.mxu0 %v1780
        %2006 = vmatprep.subr.bf16.mxu0 %v1779
        %2007 = vmatpush2.bf16.msra.mxu0 %v1778
        %2008 = vmatprep.subr.bf16.mxu0 %v1777
        %2009 = vmatpush2.bf16.msra.mxu0 %v1776
        %2010 = vmatprep.subr.bf16.mxu0 %v1775
        %2011 = vmatpush2.bf16.msra.mxu0 %v1774
        %2012 = vmatprep.subr.bf16.mxu0 %v1773
        %2013 = vmatpush2.bf16.msra.mxu0 %v1772
        %2014 = vmatprep.subr.bf16.mxu0 %v1771
        %2015 = vmatpush2.bf16.msra.mxu0 %v1770
        %2016 = vmatprep.subr.bf16.mxu0 %v1769
        %2017 = vmatpush2.bf16.msra.mxu0 %v1768
        %2018 = vmatprep.mubr.bf16.mxu0 %v1295
        %2019 = vmatmul.mubr.bf16.gmra.mxu0 %v1292
        %v2020 = vpop.f32.mrf.mxu0
        %v2021 = vadd.f32 %v1968, %v2020
        %v2022 = vpop.f32.mrf.mxu0
        %v2023 = vadd.f32 %v1970, %v2022
        %v2024 = vpop.f32.mrf.mxu0
        %v2025 = vadd.f32 %v1972, %v2024
        %v2026 = vpop.f32.mrf.mxu0
        %v2027 = vadd.f32 %v1974, %v2026
        %2028 = vmatprep.mubr.bf16.mxu0 %v1302
        %2029 = vmatmul.mubr.bf16.gmra.mxu0 %v1299
        %v2030 = vpop.f32.mrf.mxu0
        %v2031 = vadd.f32 %v1978, %v2030
        %v2032 = vpop.f32.mrf.mxu0
        %v2033 = vadd.f32 %v1980, %v2032
        %v2034 = vpop.f32.mrf.mxu0
        %v2035 = vadd.f32 %v1982, %v2034
        %v2036 = vpop.f32.mrf.mxu0
        %v2037 = vadd.f32 %v1984, %v2036
        %2038 = vdwg.mxu0
        %v2039 = vld [vmem:[%s8] sm:$0x3]
        %v2041 = vlaneseq
        %v2042 = vshrl.u32 %v2041, 7
        %v2043 = vsub.s32 0, %v2042
        %v2044 = vrot.slane %v2039, %v2043
        %v2045 = vlaneseq
        %v2046 = vshrl.u32 %v2045, 7
        %v2047 = vsub.s32 1, %v2046
        %v2048 = vrot.slane %v2039, %v2047
        %v2051 = vmul.f32 %v2021, %v2044
        %v2052 = vmul.f32 %v2023, %v2048
        %v2053 = vmul.f32 %v2025, %v2044
        %v2054 = vmul.f32 %v2027, %v2048
        %v2055 = vmul.f32 %v2031, %v2044
        %v2056 = vmul.f32 %v2033, %v2048
        %v2057 = vmul.f32 %v2035, %v2044
        %v2058 = vmul.f32 %v2037, %v2048
        %v2059 = vld [vmem:[%s9] sm:$0x3]
        %v2061 = vlaneseq
        %v2062 = vshrl.u32 %v2061, 7
        %v2063 = vsub.s32 0, %v2062
        %v2064 = vrot.slane %v2059, %v2063
        %v2065 = vlaneseq
        %v2066 = vshrl.u32 %v2065, 7
        %v2067 = vsub.s32 1, %v2066
        %v2068 = vrot.slane %v2059, %v2067
        %v2071 = vadd.f32 %v2051, %v2064
        %v2072 = vadd.f32 %v2052, %v2068
        %v2073 = vadd.f32 %v2053, %v2064
        %v2074 = vadd.f32 %v2054, %v2068
        %v2075 = vadd.f32 %v2055, %v2064
        %v2076 = vadd.f32 %v2056, %v2068
        %v2077 = vadd.f32 %v2057, %v2064
        %v2078 = vadd.f32 %v2058, %v2068
        %v2079 = vmax.f32 %v2071, 0.0
        %v2080 = vmax.f32 %v2072, 0.0
        %v2081 = vmax.f32 %v2073, 0.0
        %v2082 = vmax.f32 %v2074, 0.0
        %v2083 = vmax.f32 %v2075, 0.0
        %v2084 = vmax.f32 %v2076, 0.0
        %v2085 = vmax.f32 %v2077, 0.0
        %v2086 = vmax.f32 %v2078, 0.0
        %v2087 = vlaneseq
        %v2088 = vshrl.u32 %v2087, 7
        %v2089 = vadd.s32 %v2088, 8
        %v2090 = vadd.s32 %v2088, 16
        %v2091 = vadd.s32 %v2088, 24
        %vm2092 = vcmp.lt.s32.totalorder %v2088, 19
        %vm2093 = vcmp.lt.s32.totalorder %v2089, 19
        %vm2094 = vcmp.lt.s32.totalorder %v2090, 19
        %vm2095 = vcmp.lt.s32.totalorder %v2091, 19
        %v2096 = vsel %vm2092, %v2079, 0.0
        %v2097 = vsel %vm2092, %v2080, 0.0
        %v2098 = vsel %vm2093, %v2081, 0.0
        %v2099 = vsel %vm2093, %v2082, 0.0
        %v2100 = vsel %vm2094, %v2083, 0.0
        %v2101 = vsel %vm2094, %v2084, 0.0
        %v2102 = vsel %vm2095, %v2085, 0.0
        %v2103 = vsel %vm2095, %v2086, 0.0
        %v2104 = vadd.f32 %v2096, %v2098
        %v2105 = vadd.f32 %v2104, %v2100
        %v2106 = vadd.f32 %v2105, %v2102
        %v2107 = vrot.slane %v2106, 4
        %v2108 = vadd.f32 %v2106, %v2107
        %v2109 = vrot.slane %v2108, 2
        %v2110 = vadd.f32 %v2108, %v2109
        %v2111 = vrot.slane %v2110, 1
        %v2112 = vadd.f32 %v2110, %v2111
        %v2113 = vadd.f32 %v2097, %v2099
        %v2114 = vadd.f32 %v2113, %v2101
        %v2115 = vadd.f32 %v2114, %v2103
        %v2116 = vrot.slane %v2115, 4
        %v2117 = vadd.f32 %v2115, %v2116
        %v2118 = vrot.slane %v2117, 2
        %v2119 = vadd.f32 %v2117, %v2118
        %v2120 = vrot.slane %v2119, 1
        %v2121 = vadd.f32 %v2119, %v2120
        %v2122 = vmul.f32 %v2112, 0.05263158
        %v2123 = vmul.f32 %v2121, 0.05263158
        %v2126 = vcombine.low %v2122, %v2123
        %v2128 = vunpack.c.l.s4 1966171168
        %v2129 = vunpack.c.0.s8 %v2128
        %v2130 = vlaneseq
        %v2131 = vshrl.u32 %v2130, 7
        %v2132 = vsub.s32 %v2129, %v2131
        %v2133 = vrot.slane %v2126, %v2132
        %v2135 = vunpack.c.l.s4 1966171168
        %v2136 = vunpack.c.0.s8 %v2135
        %v2137 = vlaneseq
        %v2138 = vshrl.u32 %v2137, 7
        %v2139 = vsub.s32 %v2136, %v2138
        %v2140 = vrot.slane %v2133, %v2139
        %v2142 = vlaneseq
        %vm2143 = vcmp.ge.s32.totalorder %v2142, 0
        %vm2144 = vcmp.lt.s32.totalorder %v2142, 256
        %vm2145 = vmand %vm2143, %vm2144
        %2146 = vst.msk [vmem:[%s367] sm:$0x3] %vm2145, %v2140
        %s2147 = sand.u32 %s248, 1
        %s2148 = scalar_lea.sflag [#allocation4], %s2147
        %s2149 = sand.u32 %s248, 1
        %s2150 = smul.addr %s2149, 2
        %s2151 = scalar_lea.vmem [#allocation5], %s2150
        // Predicated region
        $region65: #{_lambda_.1} parent=59 // pred_check
          %p2152 = pneg %p258
        $region66: #{_lambda_.1} parent=59 // pred_check_branch
          %2154 = sbr.rel (%p2152) target = $region68
        $region67: #{_lambda_.1} parent=59 // pred_region
          %s2156 = ssub.s32 32, 32
          %2157 = vsyncadd %s2148, %s2156
          %s2158 = smul.addr %s25, 2
          %s2159 = smul.addr %s2158, 16
          %s2160 = scalar_lea.hbm %s10, %s2159
          %s2162 = sshll.u32 %s2151, 4
          %s2163 = int_to_ptr.vmem [resolvable:$true] %s2162
          %2165 = dma.vmem_to_hbm [thread:$0]  %s2163, 32, %s2160, %s2148
        $region68: #{_lambda_.1} parent=59 // pred_fallthru
          _
      $region60: #{_lambda_.1} parent=5 // pred_fallthru
        _
      %p2166 = scmp.le.s32.totalorder 2, %s20
      // Predicated region
      $region69: #{_lambda_.1} parent=5 // pred_check
        %p2167 = pneg %p2166
      $region70: #{_lambda_.1} parent=5 // pred_check_branch
        %2169 = sbr.rel (%p2167) target = $region72
      $region71: #{_lambda_.1} parent=5 // pred_region
        %s2170 = ssub.s32 %s20, 2
        // Predicated region
        $region73: #{_lambda_.1} parent=71 // pred_check
          %p2171 = pneg %p264
        $region74: #{_lambda_.1} parent=71 // pred_check_branch
          %2173 = sbr.rel (%p2171) target = $region76
        $region75: #{_lambda_.1} parent=71 // pred_region
          %s2174 = sand.u32 %s249, 1
          %s2175 = scalar_lea.sflag [#allocation4], %s2174
          %s2176 = sand.u32 %s249, 1
          %s2177 = smul.addr %s2176, 2
          %s2178 = scalar_lea.vmem [#allocation5], %s2177
          %2179 = dma.done %s2175, 32
        $region76: #{_lambda_.1} parent=71 // pred_fallthru
          _
      $region72: #{_lambda_.1} parent=5 // pred_fallthru
        _
    $region6: #{_lambda_.1} parent=1 // loop_footer
      %s24 = sadd.s32 1, %s20
    $region7: #{_lambda_.1} parent=1 // loop_footer_branch
      %19 = sbr.rel target = $region3
    $region8: #{_lambda_.1} parent=1 // loop_exit
      _
    %2180 = vsyncpa [#allocation3], 1
    %s2181 = scalar_lea.sflag [#allocation3], 1
    %2182 = vsyncpa %s2181, 1
    %2183 = vsyncpa [#allocation4], 1
    %s2184 = scalar_lea.sflag [#allocation4], 1
    %2185 = vsyncpa %s2184, 1

</llo_original>
